<compile_context>
chip_gen: v7x
topology: tpu7x:2x2x1
jax: 0.10.0
libtpu: 0.0.40
codegen_flags: <defaults>
</compile_context>

<pallas_src>
import jax
import jax.numpy as jnp
from jax import lax
from jax.experimental import pallas as pl
from jax.experimental.pallas import tpu as pltpu


def _dechroma_kernel(y_ref, cb_ref, cr_ref, out_ref):
    # y_ref: (TH, W)   cb_ref / cr_ref: (TH//2, W//2)   out_ref: (TH, 3*W)
    th, w = y_ref.shape
    th2, w2 = cb_ref.shape

    # One fused broadcast+reshape (single relayout) per plane:
    #   y3 [r, p] = y [r,      p // 3]
    #   cb6[r, p] = cb[r // 2, p // 6]   (rows doubled and 6x lane spread at once)
    #   cr6[r, p] = cr[r // 2, p // 6]
    y3 = jnp.broadcast_to(y_ref[...][:, :, None], (th, w, 3)).reshape(th, 3 * w)
    cb6 = jnp.broadcast_to(cb_ref[...][:, None, :, None],
                           (th2, 2, w2, 6)).reshape(th, 3 * w)
    cr6 = jnp.broadcast_to(cr_ref[...][:, None, :, None],
                           (th2, 2, w2, 6)).reshape(th, 3 * w)

    # Channel id of every interleaved output lane, built without a lane
    # relayout: flat iota along the lane axis + mod 3 (pure VPU work).
    lane = lax.broadcasted_iota(jnp.int32, (th, 3 * w), 1)
    phase = lane % 3

    # Single dense, full-lane store of the channel-interleaved row slab.
    out_ref[...] = jnp.where(phase == 0, y3, jnp.where(phase == 1, cb6, cr6))


def _row_base(itemsize):
    # Luma rows per minimal legal tile: chroma tile (th//2 rows) must be a
    # multiple of the dtype's sublane packing: f32 -> 16, bf16 -> 32, u8 -> 64.
    return 2 * 8 * max(1, 4 // itemsize)


def _vmem_budget():
    """(vmem_limit_bytes, per-step live-byte budget) per TPU generation."""
    try:
        cap = pltpu.get_tpu_info().vmem_capacity_bytes
    except Exception:
        cap = None
    if cap is not None and cap > 96 * 1024 * 1024:
        # 128 MiB parts (v5e / v6e): bigger tiles, fewer grid steps.
        # TODO(synk): on v5e, try pipeline_mode=pl.Buffered(3) on the input
        # specs if an xprof trace shows exposed DMA.
        return 64 * 1024 * 1024, 16 * 1024 * 1024
    # v7x (64 MiB per TC) or unknown: leave headroom for compiler scratch.
    return 48 * 1024 * 1024, 8 * 1024 * 1024


def _pick_tile_rows(H, W, itemsize, budget):
    """Largest luma row tile that divides H (already a multiple of `base`),
    keeps the half-height chroma tile sublane-aligned for this dtype, and keeps
    per-step live VMEM (double-buffered pipeline blocks + in-kernel
    temporaries) under `budget` bytes."""
    base = _row_base(itemsize)
    assert H % base == 0
    # Per luma row of tile, bytes live during one grid step:
    #   pipeline blocks, double-buffered: (y:W + cb:W/4 + cr:W/4 + out:3W) * 2
    #                                     = 9 * W * itemsize
    #   in-kernel temporaries y3+cb6+cr6:   9 * W * itemsize
    #   int32 lane/phase masks:           ~12 * W
    per_row = 18 * W * itemsize + 12 * W
    th = base
    while (th * 2 <= min(H, 1024) and H % (th * 2) == 0
           and (th * 2) * per_row <= budget):
        th *= 2
    return th


def dechroma_subsampling(y, cb, cr, *, tile_rows=None):
    B, H, W = y.shape
    _, H2, W2 = cb.shape
    assert cb.shape == (B, H2, W2) and cr.shape == (B, H2, W2)
    assert H == 2 * H2 and W == 2 * W2
    assert cb.dtype == y.dtype and cr.dtype == y.dtype

    itemsize = jnp.dtype(y.dtype).itemsize
    base = _row_base(itemsize)
    vmem_limit, budget = _vmem_budget()

    H_run = H
    if tile_rows is not None:
        th = tile_rows
        assert th % base == 0, f"tile_rows must be a multiple of {base}"
        assert H % th == 0
    else:
        if H % base != 0:
            # TODO(synk): a cdiv grid with a masked final row tile would avoid
            # this extra pad copy of the inputs; padding keeps every tile
            # VMEM-bounded (the old full-frame fallback blew v7x's 64 MiB VMEM
            # at e.g. 1080p).
            H_run = ((H + base - 1) // base) * base
        th = _pick_tile_rows(H_run, W, itemsize, budget)

    if H_run != H:
        ph = H_run - H
        y = jnp.pad(y, ((0, 0), (0, ph), (0, 0)))
        cb = jnp.pad(cb, ((0, 0), (0, ph // 2), (0, 0)))
        cr = jnp.pad(cr, ((0, 0), (0, ph // 2), (0, 0)))

    th2 = th // 2

    out = pl.pallas_call(
        _dechroma_kernel,
        out_shape=jax.ShapeDtypeStruct((B, H_run, 3 * W), y.dtype),
        grid_spec=pltpu.PrefetchScalarGridSpec(
            num_scalar_prefetch=0,
            grid=(B, H_run // th),
            in_specs=[
                pl.BlockSpec((None, th, W), lambda b, h: (b, h, 0)),
                pl.BlockSpec((None, th2, W2), lambda b, h: (b, h, 0)),
                pl.BlockSpec((None, th2, W2), lambda b, h: (b, h, 0)),
            ],
            out_specs=pl.BlockSpec((None, th, 3 * W), lambda b, h: (b, h, 0)),
        ),
        # TODO(synk): on v7x, if an xprof trace shows one TensorCore idle at
        # B == 1, switch the row-tile axis to pltpu.CORE_PARALLEL.
        compiler_params=pltpu.CompilerParams(
            dimension_semantics=("parallel", "parallel"),
            vmem_limit_bytes=vmem_limit,
        ),
    )(y, cb, cr)

    # Free row-major view: (B, H_run, 3*W) -> (B, H_run, W, 3); no transpose.
    # TODO(synk): confirm in the consumer's jitted HLO this stays a bitcast.
    out = out.reshape(B, H_run, W, 3)
    if H_run != H:
        out = out[:, :H]
    return out


def _reference(y, cb, cr):
    cb_up = jnp.repeat(jnp.repeat(cb, 2, axis=1), 2, axis=2)
    cr_up = jnp.repeat(jnp.repeat(cr, 2, axis=1), 2, axis=2)
    return jnp.stack([y, cb_up, cr_up], axis=-1)


if __name__ == "__main__":
    root = jax.random.PRNGKey(0)

    def run_case(B, H, W, dtype=jnp.float32, tile_rows=None):
        key = jax.random.fold_in(root, B * 100000 + H * 1000 + W)
        ky, kcb, kcr = jax.random.split(key, 3)
        y = jax.random.normal(ky, (B, H, W), dtype=jnp.float32).astype(dtype)
        cb = jax.random.normal(kcb, (B, H // 2, W // 2),
                               dtype=jnp.float32).astype(dtype)
        cr = jax.random.normal(kcr, (B, H // 2, W // 2),
                               dtype=jnp.float32).astype(dtype)
        out = jax.block_until_ready(
            dechroma_subsampling(y, cb, cr, tile_rows=tile_rows))
        ref = _reference(y, cb, cr)
        assert out.shape == (B, H, W, 3), out.shape
        assert out.dtype == y.dtype
        assert bool(jnp.array_equal(out, ref)), \
            f"mismatch vs reference at {(B, H, W, dtype)}"

    # Single full-frame tile per batch element.
    run_case(2, 16, 16)
    # Multi-tile grid path: 2 batches x 4 row tiles of 16 luma rows each.
    run_case(2, 64, 32, tile_rows=16)
    # Non-divisible height -> wrapper pad + slice path (replaces old fallback).
    run_case(1, 24, 16)
    # bf16 path (32-row base tile for sublane packing).
    run_case(1, 32, 16, dtype=jnp.bfloat16)

    print("KERNEL_OK")
</pallas_src>

<mosaic_0001>
module attributes {stable_mosaic.version = 11 : i64} {
  func.func @_dechroma_kernel(%arg0: i32, %arg1: i32, %arg2: memref<1x16x16xf32, #tpu.memory_space<vmem>>, %arg3: memref<1x8x8xf32, #tpu.memory_space<vmem>>, %arg4: memref<1x8x8xf32, #tpu.memory_space<vmem>>, %arg5: memref<1x16x48xf32, #tpu.memory_space<vmem>>) attributes {dimension_semantics = [#tpu.dimension_semantics<parallel>, #tpu.dimension_semantics<parallel>], iteration_bounds = array<i64: 2, 1>, scalar_prefetch = 0 : i64, scratch_operands = 0 : i64, tpu.core_type = #tpu.core_type<tc>, window_params = [{transform_indices = @transform_0, window_bounds = array<i64: 1, 16, 16>}, {transform_indices = @transform_1, window_bounds = array<i64: 1, 8, 8>}, {transform_indices = @transform_2, window_bounds = array<i64: 1, 8, 8>}, {transform_indices = @transform_3, window_bounds = array<i64: 1, 16, 48>}]} {
    %c0 = arith.constant 0 : index
    %c0_0 = arith.constant 0 : index
    %c0_1 = arith.constant 0 : index
    %0 = vector.load %arg2[%c0, %c0_0, %c0_1] : memref<1x16x16xf32, #tpu.memory_space<vmem>>, vector<1x16x16xf32>
    %1 = vector.shape_cast %0 : vector<1x16x16xf32> to vector<16x16xf32>
    %2 = vector.shape_cast %1 : vector<16x16xf32> to vector<16x16x1xf32>
    %3 = vector.shape_cast %2 : vector<16x16x1xf32> to vector<16x16x1xf32>
    %4 = vector.broadcast %3 : vector<16x16x1xf32> to vector<16x16x3xf32>
    %5 = vector.shape_cast %4 : vector<16x16x3xf32> to vector<16x48xf32>
    %c0_2 = arith.constant 0 : index
    %c0_3 = arith.constant 0 : index
    %c0_4 = arith.constant 0 : index
    %6 = vector.load %arg3[%c0_2, %c0_3, %c0_4] : memref<1x8x8xf32, #tpu.memory_space<vmem>>, vector<1x8x8xf32>
    %7 = vector.shape_cast %6 : vector<1x8x8xf32> to vector<8x8xf32>
    %8 = vector.shape_cast %7 : vector<8x8xf32> to vector<8x1x8x1xf32>
    %9 = vector.shape_cast %8 : vector<8x1x8x1xf32> to vector<8x1x8x1xf32>
    %10 = vector.broadcast %9 : vector<8x1x8x1xf32> to vector<8x2x8x6xf32>
    %11 = vector.shape_cast %10 : vector<8x2x8x6xf32> to vector<16x48xf32>
    %c0_5 = arith.constant 0 : index
    %c0_6 = arith.constant 0 : index
    %c0_7 = arith.constant 0 : index
    %12 = vector.load %arg4[%c0_5, %c0_6, %c0_7] : memref<1x8x8xf32, #tpu.memory_space<vmem>>, vector<1x8x8xf32>
    %13 = vector.shape_cast %12 : vector<1x8x8xf32> to vector<8x8xf32>
    %14 = vector.shape_cast %13 : vector<8x8xf32> to vector<8x1x8x1xf32>
    %15 = vector.shape_cast %14 : vector<8x1x8x1xf32> to vector<8x1x8x1xf32>
    %16 = vector.broadcast %15 : vector<8x1x8x1xf32> to vector<8x2x8x6xf32>
    %17 = vector.shape_cast %16 : vector<8x2x8x6xf32> to vector<16x48xf32>
    %18 = tpu.iota {dimensions = array<i32: 1>} : vector<16x48xi32>
    %c3_i32 = arith.constant 3 : i32
    %c0_i32 = arith.constant 0 : i32
    %19 = arith.cmpi eq, %c3_i32, %c0_i32 : i32
    %c1_i32 = arith.constant 1 : i32
    %20 = arith.select %19, %c1_i32, %c3_i32 : i32
    %21 = vector.broadcast %20 : i32 to vector<16x48xi32>
    %22 = arith.remsi %18, %21 : vector<16x48xi32>
    %c0_i32_8 = arith.constant 0 : i32
    %23 = vector.broadcast %c0_i32_8 : i32 to vector<16x48xi32>
    %24 = arith.cmpi ne, %22, %23 : vector<16x48xi32>
    %c0_i32_9 = arith.constant 0 : i32
    %25 = vector.broadcast %c0_i32_9 : i32 to vector<16x48xi32>
    %26 = arith.cmpi slt, %22, %25 : vector<16x48xi32>
    %c0_i32_10 = arith.constant 0 : i32
    %27 = arith.cmpi slt, %20, %c0_i32_10 : i32
    %28 = vector.broadcast %27 : i1 to vector<16x48xi1>
    %29 = vector.broadcast %28 : vector<16x48xi1> to vector<16x48xi1>
    %30 = arith.xori %26, %29 : vector<16x48xi1>
    %31 = arith.andi %30, %24 : vector<16x48xi1>
    %32 = vector.broadcast %20 : i32 to vector<16x48xi32>
    %33 = arith.addi %22, %32 : vector<16x48xi32>
    %34 = arith.select %31, %33, %22 : vector<16x48xi1>, vector<16x48xi32>
    %c0_i32_11 = arith.constant 0 : i32
    %35 = vector.broadcast %c0_i32_11 : i32 to vector<16x48xi32>
    %36 = arith.cmpi eq, %34, %35 : vector<16x48xi32>
    %c1_i32_12 = arith.constant 1 : i32
    %37 = vector.broadcast %c1_i32_12 : i32 to vector<16x48xi32>
    %38 = arith.cmpi eq, %34, %37 : vector<16x48xi32>
    %39 = arith.select %38, %11, %17 : vector<16x48xi1>, vector<16x48xf32>
    %40 = arith.select %36, %5, %39 : vector<16x48xi1>, vector<16x48xf32>
    %c0_13 = arith.constant 0 : index
    %c0_14 = arith.constant 0 : index
    %c0_15 = arith.constant 0 : index
    %41 = vector.load %arg5[%c0_13, %c0_14, %c0_15] : memref<1x16x48xf32, #tpu.memory_space<vmem>>, vector<1x16x48xf32>
    %42 = vector.shape_cast %41 : vector<1x16x48xf32> to vector<16x48xf32>
    %43 = vector.shape_cast %40 : vector<16x48xf32> to vector<1x16x48xf32>
    tpu.vector_store %arg5[%c0_13, %c0_14, %c0_15], %43 {strides = array<i32>} : memref<1x16x48xf32, #tpu.memory_space<vmem>>, vector<1x16x48xf32>,
    return
  }
  func.func @transform_0(%arg0: i32, %arg1: i32) -> (i32, i32, i32) {
    %c0_i32 = arith.constant 0 : i32
    %c0_i32_0 = arith.constant 0 : i32
    return %arg0, %arg1, %c0_i32 : i32, i32, i32
  }
  func.func @transform_1(%arg0: i32, %arg1: i32) -> (i32, i32, i32) {
    %c0_i32 = arith.constant 0 : i32
    %c0_i32_0 = arith.constant 0 : i32
    return %arg0, %arg1, %c0_i32 : i32, i32, i32
  }
  func.func @transform_2(%arg0: i32, %arg1: i32) -> (i32, i32, i32) {
    %c0_i32 = arith.constant 0 : i32
    %c0_i32_0 = arith.constant 0 : i32
    return %arg0, %arg1, %c0_i32 : i32, i32, i32
  }
  func.func @transform_3(%arg0: i32, %arg1: i32) -> (i32, i32, i32) {
    %c0_i32 = arith.constant 0 : i32
    %c0_i32_0 = arith.constant 0 : i32
    return %arg0, %arg1, %c0_i32 : i32, i32, i32
  }
}

</mosaic_0001>

<llo_original>
// kernel: tpu_custom_call.1
$region0: #{tpu_custom_call.1}
  #allocation0 [shape = 'u32[]', space=smem, size = 0x4, offset = 0x4, fixed_abs, tag = 'smem constant byte address 0x4 - core index']
  #allocation1 [shape = 'u32[144,128]{1,0:T(1,128)}', space=vmem, size = 0x12000, scoped, tag = 'internal scratch']
  %s0 = inlined_call_operand.hbm [shape: f32[2,16,16], index: 0, kind: input, shape index: {}]
  %s1 = inlined_call_operand.hbm [shape: f32[2,8,8], index: 1, kind: input, shape index: {}]
  %s2 = inlined_call_operand.hbm [shape: f32[2,8,8], index: 2, kind: input, shape index: {}]
  %s3 = inlined_call_operand.hbm [shape: f32[2,16,48], index: 3, kind: output, shape index: {}]
  %s4 = sld [smem:[#allocation0]]
  $region57: #{tpu_custom_call.1} parent=0
    _
  %s6 = ssub.s32 1, %s4
  %s7 = scalar_select 0, %s6, %s4
  $region1: #{tpu_custom_call.1} parent=0
    #allocation2 [shape = 'u8[16384]{0}', space=vmem, size = 0x4000, scoped, tag = 'input window, operand 0']
    #allocation3 [shape = 's32[2]{0}', space=sflag, size = 0x8, scoped, tag = 'scoped memory for tpu_custom_call.1']
    #allocation4 [shape = 's32[2]{0}', space=sflag, size = 0x8, scoped, tag = 'scoped memory for tpu_custom_call.1']
    #allocation5 [shape = 'u8[8192]{0}', space=vmem, size = 0x2000, scoped, tag = 'input window, operand 1']
    #allocation6 [shape = 's32[2]{0}', space=sflag, size = 0x8, scoped, tag = 'scoped memory for tpu_custom_call.1']
    #allocation7 [shape = 'u8[8192]{0}', space=vmem, size = 0x2000, scoped, tag = 'input window, operand 2']
    #allocation8 [shape = 'u8[16384]{0}', space=vmem, size = 0x4000, scoped, tag = 'output window, operand 0']
    %8 = vsyncpa [#allocation3], 0
    %s9 = scalar_lea.sflag [#allocation3], 1
    %10 = vsyncpa %s9, 0
    %11 = vsyncpa [#allocation6], 0
    %s12 = scalar_lea.sflag [#allocation6], 1
    %13 = vsyncpa %s12, 0
    %14 = vsyncpa [#allocation4], 0
    %s15 = scalar_lea.sflag [#allocation4], 1
    %16 = vsyncpa %s15, 0
    loop: start=0, step=1, limit=4
    $region2: #{tpu_custom_call.1} parent=1 // loop_pre_header
      _
    $region3: #{tpu_custom_call.1} parent=1 // loop_header
      %s18 = sphi 0, %s22
      %p19 = scmp.ge.s32.totalorder %s18, 4
      %s25 = sphi 0, %s37
      %s26 = sphi 0, %s33
      %s27 = sphi 0, %s25
      %s28 = sphi 0, %s26
      %s29 = sphi 0, %s27
      %s30 = sphi 0, %s28
      %s42 = sphi 0, %s44
      %s45 = sphi 0, %s42
      %s46 = sphi 0, %s45
      %s62 = sphi 0, %s46
      %s70 = sphi 0, %s72
      %s73 = sphi 0, %s70
      %s74 = sphi 0, %s73
      %s90 = sphi 0, %s74
      %s98 = sphi 0, %s100
      %s101 = sphi 0, %s98
      %s102 = sphi 0, %s101
      %s118 = sphi 0, %s102
      %s126 = sphi 0, %s128
      %s129 = sphi 0, %s126
      %s130 = sphi 0, %s129
      %s146 = sphi 0, %s130
    $region4: #{tpu_custom_call.1} parent=1 // loop_header_branch
      %21 = sbr.rel (%p19) target = $region8
    $region5: #{tpu_custom_call.1} parent=1 // loop_body
      %s23 = ssub.s32 %s18, 1
      %s24 = ssub.s32 %s18, 2
      %s31 = sadd.s32 1, %s26
      %p32 = scmp.ge.s32.totalorder %s31, 1
      %s33 = scalar_select %p32, 0, %s31
      %s34 = sadd.s32 1, %s25
      %s35 = scalar_select %p32, %s34, %s25
      %p36 = scmp.ge.s32.totalorder %s35, 2
      %s37 = scalar_select %p36, 0, %s35
      %s38 = ssub.s32 %s25, %s37
      %s39 = ssub.s32 %s26, %s33
      %s40 = sor.u32 %s38, %s39
      %p41 = scmp.eq.s32.totalorder %s40, 0
      %s43 = sadd.s32 %s42, 1
      %s44 = scalar_select %p41, %s42, %s43
      %p47 = pneg %p41
      %p48 = scmp.eq.s32.totalorder %s18, 1
      %p49 = por %p47, %p48
      %p50 = scmp.ne.s32.totalorder %s42, %s45
      %p51 = scmp.eq.s32.totalorder %s18, 0
      %p52 = por %p50, %p51
      %p53 = scmp.ne.s32.totalorder %s42, %s45
      %p54 = scmp.eq.s32.totalorder %s23, 1
      %p55 = por %p53, %p54
      %p56 = scmp.ne.s32.totalorder %s45, %s46
      %p57 = scmp.eq.s32.totalorder %s23, 0
      %p58 = por %p56, %p57
      %p59 = scmp.ne.s32.totalorder %s45, %s46
      %p60 = scmp.eq.s32.totalorder %s24, 1
      %p61 = por %p59, %p60
      %p63 = scmp.ne.s32.totalorder %s46, %s62
      %p64 = scmp.eq.s32.totalorder %s24, 0
      %p65 = por %p63, %p64
      %s66 = ssub.s32 %s25, %s37
      %s67 = ssub.s32 %s26, %s33
      %s68 = sor.u32 %s66, %s67
      %p69 = scmp.eq.s32.totalorder %s68, 0
      %s71 = sadd.s32 %s70, 1
      %s72 = scalar_select %p69, %s70, %s71
      %p75 = pneg %p69
      %p76 = scmp.eq.s32.totalorder %s18, 1
      %p77 = por %p75, %p76
      %p78 = scmp.ne.s32.totalorder %s70, %s73
      %p79 = scmp.eq.s32.totalorder %s18, 0
      %p80 = por %p78, %p79
      %p81 = scmp.ne.s32.totalorder %s70, %s73
      %p82 = scmp.eq.s32.totalorder %s23, 1
      %p83 = por %p81, %p82
      %p84 = scmp.ne.s32.totalorder %s73, %s74
      %p85 = scmp.eq.s32.totalorder %s23, 0
      %p86 = por %p84, %p85
      %p87 = scmp.ne.s32.totalorder %s73, %s74
      %p88 = scmp.eq.s32.totalorder %s24, 1
      %p89 = por %p87, %p88
      %p91 = scmp.ne.s32.totalorder %s74, %s90
      %p92 = scmp.eq.s32.totalorder %s24, 0
      %p93 = por %p91, %p92
      %s94 = ssub.s32 %s25, %s37
      %s95 = ssub.s32 %s26, %s33
      %s96 = sor.u32 %s94, %s95
      %p97 = scmp.eq.s32.totalorder %s96, 0
      %s99 = sadd.s32 %s98, 1
      %s100 = scalar_select %p97, %s98, %s99
      %p103 = pneg %p97
      %p104 = scmp.eq.s32.totalorder %s18, 1
      %p105 = por %p103, %p104
      %p106 = scmp.ne.s32.totalorder %s98, %s101
      %p107 = scmp.eq.s32.totalorder %s18, 0
      %p108 = por %p106, %p107
      %p109 = scmp.ne.s32.totalorder %s98, %s101
      %p110 = scmp.eq.s32.totalorder %s23, 1
      %p111 = por %p109, %p110
      %p112 = scmp.ne.s32.totalorder %s101, %s102
      %p113 = scmp.eq.s32.totalorder %s23, 0
      %p114 = por %p112, %p113
      %p115 = scmp.ne.s32.totalorder %s101, %s102
      %p116 = scmp.eq.s32.totalorder %s24, 1
      %p117 = por %p115, %p116
      %p119 = scmp.ne.s32.totalorder %s102, %s118
      %p120 = scmp.eq.s32.totalorder %s24, 0
      %p121 = por %p119, %p120
      %s122 = ssub.s32 %s25, %s37
      %s123 = ssub.s32 %s26, %s33
      %s124 = sor.u32 %s122, %s123
      %p125 = scmp.eq.s32.totalorder %s124, 0
      %s127 = sadd.s32 %s126, 1
      %s128 = scalar_select %p125, %s126, %s127
      %p131 = pneg %p125
      %p132 = scmp.eq.s32.totalorder %s18, 1
      %p133 = por %p131, %p132
      %p134 = scmp.ne.s32.totalorder %s126, %s129
      %p135 = scmp.eq.s32.totalorder %s18, 0
      %p136 = por %p134, %p135
      %p137 = scmp.ne.s32.totalorder %s126, %s129
      %p138 = scmp.eq.s32.totalorder %s23, 1
      %p139 = por %p137, %p138
      %p140 = scmp.ne.s32.totalorder %s129, %s130
      %p141 = scmp.eq.s32.totalorder %s23, 0
      %p142 = por %p140, %p141
      %p143 = scmp.ne.s32.totalorder %s129, %s130
      %p144 = scmp.eq.s32.totalorder %s24, 1
      %p145 = por %p143, %p144
      %p147 = scmp.ne.s32.totalorder %s130, %s146
      %p148 = scmp.eq.s32.totalorder %s24, 0
      %p149 = por %p147, %p148
      %p150 = scmp.le.s32.totalorder 1, %s18
      %p151 = scmp.lt.s32.totalorder %s18, 3
      %p152 = pnand %p150, %p151
      %p153 = pneg %p152
      // Predicated region
      $region9: #{tpu_custom_call.1} parent=5 // pred_check
        _
      $region10: #{tpu_custom_call.1} parent=5 // pred_check_branch
        %155 = sbr.rel (%p152) target = $region12
      $region11: #{tpu_custom_call.1} parent=5 // pred_region
        %s156 = ssub.s32 %s18, 1
      $region12: #{tpu_custom_call.1} parent=5 // pred_fallthru
        _
      %p157 = scmp.lt.s32.totalorder %s18, 2
      // Predicated region
      $region13: #{tpu_custom_call.1} parent=5 // pred_check
        %p158 = pneg %p157
      $region14: #{tpu_custom_call.1} parent=5 // pred_check_branch
        %160 = sbr.rel (%p158) target = $region16
      $region15: #{tpu_custom_call.1} parent=5 // pred_region
        // Predicated region
        $region17: #{tpu_custom_call.1} parent=15 // pred_check
          %p161 = pneg %p52
        $region18: #{tpu_custom_call.1} parent=15 // pred_check_branch
          %163 = sbr.rel (%p161) target = $region20
        $region19: #{tpu_custom_call.1} parent=15 // pred_region
          %s164 = sand.u32 %s42, 1
          %s165 = scalar_lea.sflag [#allocation3], %s164
          %s166 = sand.u32 %s42, 1
          %s167 = smul.addr %s166, 16
          %s168 = scalar_lea.vmem [#allocation2], %s167
          %s169 = smul.u32 2, %s26
          %s171 = ssub.s32 256, 256
          %172 = vsyncadd %s165, %s171
          %s173 = smul.addr %s25, 2
          %s174 = sadd.s32 %s169, %s173
          %s175 = smul.addr %s174, 128
          %s176 = scalar_lea.hbm %s0, %s175
          %s177 = sshll.u32 %s168, 4
          %s178 = int_to_ptr.vmem [resolvable:$true] %s177
          %183 = dma.hbm_to_vmem [thread:$0]  %s176, 256, %s178, %s165, 128, 128, 8
        $region20: #{tpu_custom_call.1} parent=15 // pred_fallthru
          _
        // Predicated region
        $region21: #{tpu_custom_call.1} parent=15 // pred_check
          %p184 = pneg %p80
        $region22: #{tpu_custom_call.1} parent=15 // pred_check_branch
          %186 = sbr.rel (%p184) target = $region24
        $region23: #{tpu_custom_call.1} parent=15 // pred_region
          %s187 = sand.u32 %s18, 1
          %s188 = scalar_lea.sflag [#allocation6], %s187
          %s189 = sand.u32 %s70, 1
          %s190 = smul.addr %s189, 8
          %s191 = scalar_lea.vmem [#allocation5], %s190
          %s193 = ssub.s32 128, 128
          %194 = vsyncadd %s188, %s193
          %s195 = sadd.s32 %s26, %s25
          %s196 = smul.addr %s195, 128
          %s197 = scalar_lea.hbm %s1, %s196
          %s199 = sshll.u32 %s191, 4
          %s200 = int_to_ptr.vmem [resolvable:$true] %s199
          %202 = dma.hbm_to_vmem [thread:$0]  %s197, 128, %s200, %s188
        $region24: #{tpu_custom_call.1} parent=15 // pred_fallthru
          _
        // Predicated region
        $region25: #{tpu_custom_call.1} parent=15 // pred_check
          %p203 = pneg %p108
        $region26: #{tpu_custom_call.1} parent=15 // pred_check_branch
          %205 = sbr.rel (%p203) target = $region28
        $region27: #{tpu_custom_call.1} parent=15 // pred_region
          %s206 = sand.u32 %s18, 1
          %s207 = scalar_lea.sflag [#allocation6], %s206
          %s208 = sand.u32 %s98, 1
          %s209 = smul.addr %s208, 8
          %s210 = scalar_lea.vmem [#allocation7], %s209
          %s212 = ssub.s32 128, 128
          %213 = vsyncadd %s207, %s212
          %s214 = sadd.s32 %s26, %s25
          %s215 = smul.addr %s214, 128
          %s216 = scalar_lea.hbm %s2, %s215
          %s218 = sshll.u32 %s210, 4
          %s219 = int_to_ptr.vmem [resolvable:$true] %s218
          %221 = dma.hbm_to_vmem [thread:$0]  %s216, 128, %s219, %s207
        $region28: #{tpu_custom_call.1} parent=15 // pred_fallthru
          _
      $region16: #{tpu_custom_call.1} parent=5 // pred_fallthru
        _
      %p222 = scmp.le.s32.totalorder 1, %s18
      %p223 = scmp.lt.s32.totalorder %s18, 3
      %p224 = pnand %p222, %p223
      %p225 = pneg %p224
      // Predicated region
      $region29: #{tpu_custom_call.1} parent=5 // pred_check
        _
      $region30: #{tpu_custom_call.1} parent=5 // pred_check_branch
        %227 = sbr.rel (%p224) target = $region32
      $region31: #{tpu_custom_call.1} parent=5 // pred_region
        %s228 = ssub.s32 %s18, 1
        %s229 = sand.u32 %s45, 1
        %s230 = scalar_lea.sflag [#allocation3], %s229
        %s231 = sand.u32 %s45, 1
        %s232 = smul.addr %s231, 16
        %s233 = scalar_lea.vmem [#allocation2], %s232
        // Predicated region
        $region33: #{tpu_custom_call.1} parent=31 // pred_check
          %p234 = pneg %p58
        $region34: #{tpu_custom_call.1} parent=31 // pred_check_branch
          %236 = sbr.rel (%p234) target = $region36
        $region35: #{tpu_custom_call.1} parent=31 // pred_region
          %237 = dma.done %s230, 256
        $region36: #{tpu_custom_call.1} parent=31 // pred_fallthru
          _
        %s238 = sand.u32 %s23, 1
        %s239 = scalar_lea.sflag [#allocation6], %s238
        %s240 = sand.u32 %s73, 1
        %s241 = smul.addr %s240, 8
        %s242 = scalar_lea.vmem [#allocation5], %s241
        // Predicated region
        $region37: #{tpu_custom_call.1} parent=31 // pred_check
          %p243 = pneg %p86
        $region38: #{tpu_custom_call.1} parent=31 // pred_check_branch
          %245 = sbr.rel (%p243) target = $region40
        $region39: #{tpu_custom_call.1} parent=31 // pred_region
          %246 = dma.done %s239, 128
        $region40: #{tpu_custom_call.1} parent=31 // pred_fallthru
          _
        %s247 = sand.u32 %s23, 1
        %s248 = scalar_lea.sflag [#allocation6], %s247
        %s249 = sand.u32 %s101, 1
        %s250 = smul.addr %s249, 8
        %s251 = scalar_lea.vmem [#allocation7], %s250
        // Predicated region
        $region41: #{tpu_custom_call.1} parent=31 // pred_check
          %p252 = pneg %p114
        $region42: #{tpu_custom_call.1} parent=31 // pred_check_branch
          %254 = sbr.rel (%p252) target = $region44
        $region43: #{tpu_custom_call.1} parent=31 // pred_region
          %255 = dma.done %s248, 128
        $region44: #{tpu_custom_call.1} parent=31 // pred_fallthru
          _
        %s256 = sand.u32 %s45, 1
        %s257 = scalar_lea.sflag [#allocation3], %s256
        %s258 = sand.u32 %s45, 1
        %s259 = smul.addr %s258, 16
        %s260 = scalar_lea.vmem [#allocation2], %s259
        %p261 = pneg %p58
        %p262 = pneg %p55
        %s263 = sand.u32 %s23, 1
        %s264 = scalar_lea.sflag [#allocation6], %s263
        %s265 = sand.u32 %s73, 1
        %s266 = smul.addr %s265, 8
        %s267 = scalar_lea.vmem [#allocation5], %s266
        %p268 = pneg %p86
        %p269 = pneg %p83
        %s270 = sand.u32 %s23, 1
        %s271 = scalar_lea.sflag [#allocation6], %s270
        %s272 = sand.u32 %s101, 1
        %s273 = smul.addr %s272, 8
        %s274 = scalar_lea.vmem [#allocation7], %s273
        %p275 = pneg %p114
        %p276 = pneg %p111
        %p277 = pneg %p142
        %p278 = pneg %p139
        %s279 = sand.u32 %s129, 1
        %s280 = scalar_lea.sflag [#allocation4], %s279
        %s281 = sand.u32 %s129, 1
        %s282 = smul.addr %s281, 16
        %s283 = scalar_lea.vmem [#allocation8], %s282
        %s284 = smul.u32 2, %s28
        %s285 = smul.u32 2, %s28
        %v286 = vld [vmem:[%s233] sm:$0xff]
        %v287 = vld [vmem:[%s233 + $0x8] sm:$0xff]
        %v288 = vlaneseq
        %v289 = vshrl.u32 %v288, 7
        %v290 = vsub.s32 0, %v289
        %v291 = vrot.slane %v286, %v290
        %293 = vbcast.lane.b32.xlu0 %v291, 256
        %v294 = vpop.permute.xlu0 %293
        %s296 = sor.u32 256, 8
        %297 = vbcast.lane.b32.xlu0 %v291, %s296
        %v298 = vpop.permute.xlu0 %297
        %v299 = vlaneseq
        %v300 = vshrl.u32 %v299, 7
        %v301 = vsub.s32 1, %v300
        %v302 = vrot.slane %v286, %v301
        %304 = vbcast.lane.b32.xlu0 %v302, 256
        %v305 = vpop.permute.xlu0 %304
        %s307 = sor.u32 256, 8
        %308 = vbcast.lane.b32.xlu0 %v302, %s307
        %v309 = vpop.permute.xlu0 %308
        %v310 = vlaneseq
        %v311 = vshrl.u32 %v310, 7
        %v312 = vsub.s32 2, %v311
        %v313 = vrot.slane %v286, %v312
        %315 = vbcast.lane.b32.xlu0 %v313, 256
        %v316 = vpop.permute.xlu0 %315
        %s318 = sor.u32 256, 8
        %319 = vbcast.lane.b32.xlu0 %v313, %s318
        %v320 = vpop.permute.xlu0 %319
        %v321 = vlaneseq
        %v322 = vshrl.u32 %v321, 7
        %v323 = vsub.s32 3, %v322
        %v324 = vrot.slane %v286, %v323
        %326 = vbcast.lane.b32.xlu0 %v324, 256
        %v327 = vpop.permute.xlu0 %326
        %s329 = sor.u32 256, 8
        %330 = vbcast.lane.b32.xlu0 %v324, %s329
        %v331 = vpop.permute.xlu0 %330
        %v332 = vlaneseq
        %v333 = vshrl.u32 %v332, 7
        %v334 = vsub.s32 4, %v333
        %v335 = vrot.slane %v286, %v334
        %337 = vbcast.lane.b32.xlu0 %v335, 256
        %v338 = vpop.permute.xlu0 %337
        %s340 = sor.u32 256, 8
        %341 = vbcast.lane.b32.xlu0 %v335, %s340
        %v342 = vpop.permute.xlu0 %341
        %v343 = vlaneseq
        %v344 = vshrl.u32 %v343, 7
        %v345 = vsub.s32 5, %v344
        %v346 = vrot.slane %v286, %v345
        %348 = vbcast.lane.b32.xlu0 %v346, 256
        %v349 = vpop.permute.xlu0 %348
        %s351 = sor.u32 256, 8
        %352 = vbcast.lane.b32.xlu0 %v346, %s351
        %v353 = vpop.permute.xlu0 %352
        %v354 = vlaneseq
        %v355 = vshrl.u32 %v354, 7
        %v356 = vsub.s32 6, %v355
        %v357 = vrot.slane %v286, %v356
        %359 = vbcast.lane.b32.xlu0 %v357, 256
        %v360 = vpop.permute.xlu0 %359
        %s362 = sor.u32 256, 8
        %363 = vbcast.lane.b32.xlu0 %v357, %s362
        %v364 = vpop.permute.xlu0 %363
        %v365 = vlaneseq
        %v366 = vshrl.u32 %v365, 7
        %v367 = vsub.s32 7, %v366
        %v368 = vrot.slane %v286, %v367
        %370 = vbcast.lane.b32.xlu0 %v368, 256
        %v371 = vpop.permute.xlu0 %370
        %s373 = sor.u32 256, 8
        %374 = vbcast.lane.b32.xlu0 %v368, %s373
        %v375 = vpop.permute.xlu0 %374
        %v376 = vlaneseq
        %v377 = vshrl.u32 %v376, 7
        %v378 = vsub.s32 0, %v377
        %v379 = vrot.slane %v287, %v378
        %381 = vbcast.lane.b32.xlu0 %v379, 256
        %v382 = vpop.permute.xlu0 %381
        %s384 = sor.u32 256, 8
        %385 = vbcast.lane.b32.xlu0 %v379, %s384
        %v386 = vpop.permute.xlu0 %385
        %v387 = vlaneseq
        %v388 = vshrl.u32 %v387, 7
        %v389 = vsub.s32 1, %v388
        %v390 = vrot.slane %v287, %v389
        %392 = vbcast.lane.b32.xlu0 %v390, 256
        %v393 = vpop.permute.xlu0 %392
        %s395 = sor.u32 256, 8
        %396 = vbcast.lane.b32.xlu0 %v390, %s395
        %v397 = vpop.permute.xlu0 %396
        %v398 = vlaneseq
        %v399 = vshrl.u32 %v398, 7
        %v400 = vsub.s32 2, %v399
        %v401 = vrot.slane %v287, %v400
        %403 = vbcast.lane.b32.xlu0 %v401, 256
        %v404 = vpop.permute.xlu0 %403
        %s406 = sor.u32 256, 8
        %407 = vbcast.lane.b32.xlu0 %v401, %s406
        %v408 = vpop.permute.xlu0 %407
        %v409 = vlaneseq
        %v410 = vshrl.u32 %v409, 7
        %v411 = vsub.s32 3, %v410
        %v412 = vrot.slane %v287, %v411
        %414 = vbcast.lane.b32.xlu0 %v412, 256
        %v415 = vpop.permute.xlu0 %414
        %s417 = sor.u32 256, 8
        %418 = vbcast.lane.b32.xlu0 %v412, %s417
        %v419 = vpop.permute.xlu0 %418
        %v420 = vlaneseq
        %v421 = vshrl.u32 %v420, 7
        %v422 = vsub.s32 4, %v421
        %v423 = vrot.slane %v287, %v422
        %425 = vbcast.lane.b32.xlu0 %v423, 256
        %v426 = vpop.permute.xlu0 %425
        %s428 = sor.u32 256, 8
        %429 = vbcast.lane.b32.xlu0 %v423, %s428
        %v430 = vpop.permute.xlu0 %429
        %v431 = vlaneseq
        %v432 = vshrl.u32 %v431, 7
        %v433 = vsub.s32 5, %v432
        %v434 = vrot.slane %v287, %v433
        %436 = vbcast.lane.b32.xlu0 %v434, 256
        %v437 = vpop.permute.xlu0 %436
        %s439 = sor.u32 256, 8
        %440 = vbcast.lane.b32.xlu0 %v434, %s439
        %v441 = vpop.permute.xlu0 %440
        %v442 = vlaneseq
        %v443 = vshrl.u32 %v442, 7
        %v444 = vsub.s32 6, %v443
        %v445 = vrot.slane %v287, %v444
        %447 = vbcast.lane.b32.xlu0 %v445, 256
        %v448 = vpop.permute.xlu0 %447
        %s450 = sor.u32 256, 8
        %451 = vbcast.lane.b32.xlu0 %v445, %s450
        %v452 = vpop.permute.xlu0 %451
        %v453 = vlaneseq
        %v454 = vshrl.u32 %v453, 7
        %v455 = vsub.s32 7, %v454
        %v456 = vrot.slane %v287, %v455
        %458 = vbcast.lane.b32.xlu0 %v456, 256
        %v459 = vpop.permute.xlu0 %458
        %s461 = sor.u32 256, 8
        %462 = vbcast.lane.b32.xlu0 %v456, %s461
        %v463 = vpop.permute.xlu0 %462
        %v464 = vcombine.low %v294, %v316
        %v465 = vcombine.high %v294, %v316
        %v467 = vunpack.c.l.s4 1983009808
        %v468 = vunpack.c.0.s8 %v467
        %v469 = vlaneseq
        %v470 = vshrl.u32 %v469, 7
        %v471 = vsub.s32 %v468, %v470
        %v472 = vrot.slane %v464, %v471
        %v474 = vunpack.c.l.s4 1983009808
        %v475 = vunpack.c.0.s8 %v474
        %v476 = vlaneseq
        %v477 = vshrl.u32 %v476, 7
        %v478 = vsub.s32 %v475, %v477
        %v479 = vrot.slane %v465, %v478
        %v480 = vcombine.low %v305, %v327
        %v481 = vcombine.high %v305, %v327
        %v483 = vunpack.c.l.s4 1983009808
        %v484 = vunpack.c.0.s8 %v483
        %v485 = vlaneseq
        %v486 = vshrl.u32 %v485, 7
        %v487 = vsub.s32 %v484, %v486
        %v488 = vrot.slane %v480, %v487
        %v490 = vunpack.c.l.s4 1983009808
        %v491 = vunpack.c.0.s8 %v490
        %v492 = vlaneseq
        %v493 = vshrl.u32 %v492, 7
        %v494 = vsub.s32 %v491, %v493
        %v495 = vrot.slane %v481, %v494
        %v496 = vcombine.low %v338, %v360
        %v497 = vcombine.high %v338, %v360
        %v499 = vunpack.c.l.s4 1983009808
        %v500 = vunpack.c.0.s8 %v499
        %v501 = vlaneseq
        %v502 = vshrl.u32 %v501, 7
        %v503 = vsub.s32 %v500, %v502
        %v504 = vrot.slane %v496, %v503
        %v506 = vunpack.c.l.s4 1983009808
        %v507 = vunpack.c.0.s8 %v506
        %v508 = vlaneseq
        %v509 = vshrl.u32 %v508, 7
        %v510 = vsub.s32 %v507, %v509
        %v511 = vrot.slane %v497, %v510
        %v512 = vcombine.low %v349, %v371
        %v513 = vcombine.high %v349, %v371
        %v515 = vunpack.c.l.s4 1983009808
        %v516 = vunpack.c.0.s8 %v515
        %v517 = vlaneseq
        %v518 = vshrl.u32 %v517, 7
        %v519 = vsub.s32 %v516, %v518
        %v520 = vrot.slane %v512, %v519
        %v522 = vunpack.c.l.s4 1983009808
        %v523 = vunpack.c.0.s8 %v522
        %v524 = vlaneseq
        %v525 = vshrl.u32 %v524, 7
        %v526 = vsub.s32 %v523, %v525
        %v527 = vrot.slane %v513, %v526
        %v528 = vcombine.low %v472, %v488
        %v529 = vcombine.high %v472, %v488
        %v531 = vunpack.c.l.s4 1934713408
        %v532 = vunpack.c.0.s8 %v531
        %v533 = vlaneseq
        %v534 = vshrl.u32 %v533, 7
        %v535 = vsub.s32 %v532, %v534
        %v536 = vrot.slane %v528, %v535
        %v538 = vunpack.c.l.s4 1934713408
        %v539 = vunpack.c.0.s8 %v538
        %v540 = vlaneseq
        %v541 = vshrl.u32 %v540, 7
        %v542 = vsub.s32 %v539, %v541
        %v543 = vrot.slane %v529, %v542
        %v544 = vcombine.low %v479, %v495
        %v545 = vcombine.high %v479, %v495
        %v547 = vunpack.c.l.s4 1934713408
        %v548 = vunpack.c.0.s8 %v547
        %v549 = vlaneseq
        %v550 = vshrl.u32 %v549, 7
        %v551 = vsub.s32 %v548, %v550
        %v552 = vrot.slane %v544, %v551
        %v554 = vunpack.c.l.s4 1934713408
        %v555 = vunpack.c.0.s8 %v554
        %v556 = vlaneseq
        %v557 = vshrl.u32 %v556, 7
        %v558 = vsub.s32 %v555, %v557
        %v559 = vrot.slane %v545, %v558
        %v560 = vcombine.low %v504, %v520
        %v561 = vcombine.high %v504, %v520
        %v563 = vunpack.c.l.s4 1934713408
        %v564 = vunpack.c.0.s8 %v563
        %v565 = vlaneseq
        %v566 = vshrl.u32 %v565, 7
        %v567 = vsub.s32 %v564, %v566
        %v568 = vrot.slane %v560, %v567
        %v570 = vunpack.c.l.s4 1934713408
        %v571 = vunpack.c.0.s8 %v570
        %v572 = vlaneseq
        %v573 = vshrl.u32 %v572, 7
        %v574 = vsub.s32 %v571, %v573
        %v575 = vrot.slane %v561, %v574
        %v576 = vcombine.low %v511, %v527
        %v577 = vcombine.high %v511, %v527
        %v579 = vunpack.c.l.s4 1934713408
        %v580 = vunpack.c.0.s8 %v579
        %v581 = vlaneseq
        %v582 = vshrl.u32 %v581, 7
        %v583 = vsub.s32 %v580, %v582
        %v584 = vrot.slane %v576, %v583
        %v586 = vunpack.c.l.s4 1934713408
        %v587 = vunpack.c.0.s8 %v586
        %v588 = vlaneseq
        %v589 = vshrl.u32 %v588, 7
        %v590 = vsub.s32 %v587, %v589
        %v591 = vrot.slane %v577, %v590
        %v592 = vcombine.low %v536, %v568
        %v593 = vcombine.high %v536, %v568
        %v594 = vcombine.low %v543, %v575
        %v595 = vcombine.high %v543, %v575
        %v596 = vcombine.low %v552, %v584
        %v597 = vcombine.high %v552, %v584
        %v598 = vcombine.low %v559, %v591
        %v599 = vcombine.high %v559, %v591
        %v600 = vcombine.low %v382, %v404
        %v601 = vcombine.high %v382, %v404
        %v603 = vunpack.c.l.s4 1983009808
        %v604 = vunpack.c.0.s8 %v603
        %v605 = vlaneseq
        %v606 = vshrl.u32 %v605, 7
        %v607 = vsub.s32 %v604, %v606
        %v608 = vrot.slane %v600, %v607
        %v610 = vunpack.c.l.s4 1983009808
        %v611 = vunpack.c.0.s8 %v610
        %v612 = vlaneseq
        %v613 = vshrl.u32 %v612, 7
        %v614 = vsub.s32 %v611, %v613
        %v615 = vrot.slane %v601, %v614
        %v616 = vcombine.low %v393, %v415
        %v617 = vcombine.high %v393, %v415
        %v619 = vunpack.c.l.s4 1983009808
        %v620 = vunpack.c.0.s8 %v619
        %v621 = vlaneseq
        %v622 = vshrl.u32 %v621, 7
        %v623 = vsub.s32 %v620, %v622
        %v624 = vrot.slane %v616, %v623
        %v626 = vunpack.c.l.s4 1983009808
        %v627 = vunpack.c.0.s8 %v626
        %v628 = vlaneseq
        %v629 = vshrl.u32 %v628, 7
        %v630 = vsub.s32 %v627, %v629
        %v631 = vrot.slane %v617, %v630
        %v632 = vcombine.low %v426, %v448
        %v633 = vcombine.high %v426, %v448
        %v635 = vunpack.c.l.s4 1983009808
        %v636 = vunpack.c.0.s8 %v635
        %v637 = vlaneseq
        %v638 = vshrl.u32 %v637, 7
        %v639 = vsub.s32 %v636, %v638
        %v640 = vrot.slane %v632, %v639
        %v642 = vunpack.c.l.s4 1983009808
        %v643 = vunpack.c.0.s8 %v642
        %v644 = vlaneseq
        %v645 = vshrl.u32 %v644, 7
        %v646 = vsub.s32 %v643, %v645
        %v647 = vrot.slane %v633, %v646
        %v648 = vcombine.low %v437, %v459
        %v649 = vcombine.high %v437, %v459
        %v651 = vunpack.c.l.s4 1983009808
        %v652 = vunpack.c.0.s8 %v651
        %v653 = vlaneseq
        %v654 = vshrl.u32 %v653, 7
        %v655 = vsub.s32 %v652, %v654
        %v656 = vrot.slane %v648, %v655
        %v658 = vunpack.c.l.s4 1983009808
        %v659 = vunpack.c.0.s8 %v658
        %v660 = vlaneseq
        %v661 = vshrl.u32 %v660, 7
        %v662 = vsub.s32 %v659, %v661
        %v663 = vrot.slane %v649, %v662
        %v664 = vcombine.low %v608, %v624
        %v665 = vcombine.high %v608, %v624
        %v667 = vunpack.c.l.s4 1934713408
        %v668 = vunpack.c.0.s8 %v667
        %v669 = vlaneseq
        %v670 = vshrl.u32 %v669, 7
        %v671 = vsub.s32 %v668, %v670
        %v672 = vrot.slane %v664, %v671
        %v674 = vunpack.c.l.s4 1934713408
        %v675 = vunpack.c.0.s8 %v674
        %v676 = vlaneseq
        %v677 = vshrl.u32 %v676, 7
        %v678 = vsub.s32 %v675, %v677
        %v679 = vrot.slane %v665, %v678
        %v680 = vcombine.low %v615, %v631
        %v681 = vcombine.high %v615, %v631
        %v683 = vunpack.c.l.s4 1934713408
        %v684 = vunpack.c.0.s8 %v683
        %v685 = vlaneseq
        %v686 = vshrl.u32 %v685, 7
        %v687 = vsub.s32 %v684, %v686
        %v688 = vrot.slane %v680, %v687
        %v690 = vunpack.c.l.s4 1934713408
        %v691 = vunpack.c.0.s8 %v690
        %v692 = vlaneseq
        %v693 = vshrl.u32 %v692, 7
        %v694 = vsub.s32 %v691, %v693
        %v695 = vrot.slane %v681, %v694
        %v696 = vcombine.low %v640, %v656
        %v697 = vcombine.high %v640, %v656
        %v699 = vunpack.c.l.s4 1934713408
        %v700 = vunpack.c.0.s8 %v699
        %v701 = vlaneseq
        %v702 = vshrl.u32 %v701, 7
        %v703 = vsub.s32 %v700, %v702
        %v704 = vrot.slane %v696, %v703
        %v706 = vunpack.c.l.s4 1934713408
        %v707 = vunpack.c.0.s8 %v706
        %v708 = vlaneseq
        %v709 = vshrl.u32 %v708, 7
        %v710 = vsub.s32 %v707, %v709
        %v711 = vrot.slane %v697, %v710
        %v712 = vcombine.low %v647, %v663
        %v713 = vcombine.high %v647, %v663
        %v715 = vunpack.c.l.s4 1934713408
        %v716 = vunpack.c.0.s8 %v715
        %v717 = vlaneseq
        %v718 = vshrl.u32 %v717, 7
        %v719 = vsub.s32 %v716, %v718
        %v720 = vrot.slane %v712, %v719
        %v722 = vunpack.c.l.s4 1934713408
        %v723 = vunpack.c.0.s8 %v722
        %v724 = vlaneseq
        %v725 = vshrl.u32 %v724, 7
        %v726 = vsub.s32 %v723, %v725
        %v727 = vrot.slane %v713, %v726
        %v728 = vcombine.low %v672, %v704
        %v729 = vcombine.high %v672, %v704
        %v730 = vcombine.low %v679, %v711
        %v731 = vcombine.high %v679, %v711
        %v732 = vcombine.low %v688, %v720
        %v733 = vcombine.high %v688, %v720
        %v734 = vcombine.low %v695, %v727
        %v735 = vcombine.high %v695, %v727
        %v736 = vcombine.low %v298, %v320
        %v737 = vcombine.high %v298, %v320
        %v739 = vunpack.c.l.s4 1983009808
        %v740 = vunpack.c.0.s8 %v739
        %v741 = vlaneseq
        %v742 = vshrl.u32 %v741, 7
        %v743 = vsub.s32 %v740, %v742
        %v744 = vrot.slane %v736, %v743
        %v746 = vunpack.c.l.s4 1983009808
        %v747 = vunpack.c.0.s8 %v746
        %v748 = vlaneseq
        %v749 = vshrl.u32 %v748, 7
        %v750 = vsub.s32 %v747, %v749
        %v751 = vrot.slane %v737, %v750
        %v752 = vcombine.low %v309, %v331
        %v753 = vcombine.high %v309, %v331
        %v755 = vunpack.c.l.s4 1983009808
        %v756 = vunpack.c.0.s8 %v755
        %v757 = vlaneseq
        %v758 = vshrl.u32 %v757, 7
        %v759 = vsub.s32 %v756, %v758
        %v760 = vrot.slane %v752, %v759
        %v762 = vunpack.c.l.s4 1983009808
        %v763 = vunpack.c.0.s8 %v762
        %v764 = vlaneseq
        %v765 = vshrl.u32 %v764, 7
        %v766 = vsub.s32 %v763, %v765
        %v767 = vrot.slane %v753, %v766
        %v768 = vcombine.low %v342, %v364
        %v769 = vcombine.high %v342, %v364
        %v771 = vunpack.c.l.s4 1983009808
        %v772 = vunpack.c.0.s8 %v771
        %v773 = vlaneseq
        %v774 = vshrl.u32 %v773, 7
        %v775 = vsub.s32 %v772, %v774
        %v776 = vrot.slane %v768, %v775
        %v778 = vunpack.c.l.s4 1983009808
        %v779 = vunpack.c.0.s8 %v778
        %v780 = vlaneseq
        %v781 = vshrl.u32 %v780, 7
        %v782 = vsub.s32 %v779, %v781
        %v783 = vrot.slane %v769, %v782
        %v784 = vcombine.low %v353, %v375
        %v785 = vcombine.high %v353, %v375
        %v787 = vunpack.c.l.s4 1983009808
        %v788 = vunpack.c.0.s8 %v787
        %v789 = vlaneseq
        %v790 = vshrl.u32 %v789, 7
        %v791 = vsub.s32 %v788, %v790
        %v792 = vrot.slane %v784, %v791
        %v794 = vunpack.c.l.s4 1983009808
        %v795 = vunpack.c.0.s8 %v794
        %v796 = vlaneseq
        %v797 = vshrl.u32 %v796, 7
        %v798 = vsub.s32 %v795, %v797
        %v799 = vrot.slane %v785, %v798
        %v800 = vcombine.low %v744, %v760
        %v801 = vcombine.high %v744, %v760
        %v803 = vunpack.c.l.s4 1934713408
        %v804 = vunpack.c.0.s8 %v803
        %v805 = vlaneseq
        %v806 = vshrl.u32 %v805, 7
        %v807 = vsub.s32 %v804, %v806
        %v808 = vrot.slane %v800, %v807
        %v810 = vunpack.c.l.s4 1934713408
        %v811 = vunpack.c.0.s8 %v810
        %v812 = vlaneseq
        %v813 = vshrl.u32 %v812, 7
        %v814 = vsub.s32 %v811, %v813
        %v815 = vrot.slane %v801, %v814
        %v816 = vcombine.low %v751, %v767
        %v817 = vcombine.high %v751, %v767
        %v819 = vunpack.c.l.s4 1934713408
        %v820 = vunpack.c.0.s8 %v819
        %v821 = vlaneseq
        %v822 = vshrl.u32 %v821, 7
        %v823 = vsub.s32 %v820, %v822
        %v824 = vrot.slane %v816, %v823
        %v826 = vunpack.c.l.s4 1934713408
        %v827 = vunpack.c.0.s8 %v826
        %v828 = vlaneseq
        %v829 = vshrl.u32 %v828, 7
        %v830 = vsub.s32 %v827, %v829
        %v831 = vrot.slane %v817, %v830
        %v832 = vcombine.low %v776, %v792
        %v833 = vcombine.high %v776, %v792
        %v835 = vunpack.c.l.s4 1934713408
        %v836 = vunpack.c.0.s8 %v835
        %v837 = vlaneseq
        %v838 = vshrl.u32 %v837, 7
        %v839 = vsub.s32 %v836, %v838
        %v840 = vrot.slane %v832, %v839
        %v842 = vunpack.c.l.s4 1934713408
        %v843 = vunpack.c.0.s8 %v842
        %v844 = vlaneseq
        %v845 = vshrl.u32 %v844, 7
        %v846 = vsub.s32 %v843, %v845
        %v847 = vrot.slane %v833, %v846
        %v848 = vcombine.low %v783, %v799
        %v849 = vcombine.high %v783, %v799
        %v851 = vunpack.c.l.s4 1934713408
        %v852 = vunpack.c.0.s8 %v851
        %v853 = vlaneseq
        %v854 = vshrl.u32 %v853, 7
        %v855 = vsub.s32 %v852, %v854
        %v856 = vrot.slane %v848, %v855
        %v858 = vunpack.c.l.s4 1934713408
        %v859 = vunpack.c.0.s8 %v858
        %v860 = vlaneseq
        %v861 = vshrl.u32 %v860, 7
        %v862 = vsub.s32 %v859, %v861
        %v863 = vrot.slane %v849, %v862
        %v864 = vcombine.low %v808, %v840
        %v865 = vcombine.high %v808, %v840
        %v866 = vcombine.low %v815, %v847
        %v867 = vcombine.high %v815, %v847
        %v868 = vcombine.low %v824, %v856
        %v869 = vcombine.high %v824, %v856
        %v870 = vcombine.low %v831, %v863
        %v871 = vcombine.high %v831, %v863
        %v872 = vcombine.low %v386, %v408
        %v873 = vcombine.high %v386, %v408
        %v875 = vunpack.c.l.s4 1983009808
        %v876 = vunpack.c.0.s8 %v875
        %v877 = vlaneseq
        %v878 = vshrl.u32 %v877, 7
        %v879 = vsub.s32 %v876, %v878
        %v880 = vrot.slane %v872, %v879
        %v882 = vunpack.c.l.s4 1983009808
        %v883 = vunpack.c.0.s8 %v882
        %v884 = vlaneseq
        %v885 = vshrl.u32 %v884, 7
        %v886 = vsub.s32 %v883, %v885
        %v887 = vrot.slane %v873, %v886
        %v888 = vcombine.low %v397, %v419
        %v889 = vcombine.high %v397, %v419
        %v891 = vunpack.c.l.s4 1983009808
        %v892 = vunpack.c.0.s8 %v891
        %v893 = vlaneseq
        %v894 = vshrl.u32 %v893, 7
        %v895 = vsub.s32 %v892, %v894
        %v896 = vrot.slane %v888, %v895
        %v898 = vunpack.c.l.s4 1983009808
        %v899 = vunpack.c.0.s8 %v898
        %v900 = vlaneseq
        %v901 = vshrl.u32 %v900, 7
        %v902 = vsub.s32 %v899, %v901
        %v903 = vrot.slane %v889, %v902
        %v904 = vcombine.low %v430, %v452
        %v905 = vcombine.high %v430, %v452
        %v907 = vunpack.c.l.s4 1983009808
        %v908 = vunpack.c.0.s8 %v907
        %v909 = vlaneseq
        %v910 = vshrl.u32 %v909, 7
        %v911 = vsub.s32 %v908, %v910
        %v912 = vrot.slane %v904, %v911
        %v914 = vunpack.c.l.s4 1983009808
        %v915 = vunpack.c.0.s8 %v914
        %v916 = vlaneseq
        %v917 = vshrl.u32 %v916, 7
        %v918 = vsub.s32 %v915, %v917
        %v919 = vrot.slane %v905, %v918
        %v920 = vcombine.low %v441, %v463
        %v921 = vcombine.high %v441, %v463
        %v923 = vunpack.c.l.s4 1983009808
        %v924 = vunpack.c.0.s8 %v923
        %v925 = vlaneseq
        %v926 = vshrl.u32 %v925, 7
        %v927 = vsub.s32 %v924, %v926
        %v928 = vrot.slane %v920, %v927
        %v930 = vunpack.c.l.s4 1983009808
        %v931 = vunpack.c.0.s8 %v930
        %v932 = vlaneseq
        %v933 = vshrl.u32 %v932, 7
        %v934 = vsub.s32 %v931, %v933
        %v935 = vrot.slane %v921, %v934
        %v936 = vcombine.low %v880, %v896
        %v937 = vcombine.high %v880, %v896
        %v939 = vunpack.c.l.s4 1934713408
        %v940 = vunpack.c.0.s8 %v939
        %v941 = vlaneseq
        %v942 = vshrl.u32 %v941, 7
        %v943 = vsub.s32 %v940, %v942
        %v944 = vrot.slane %v936, %v943
        %v946 = vunpack.c.l.s4 1934713408
        %v947 = vunpack.c.0.s8 %v946
        %v948 = vlaneseq
        %v949 = vshrl.u32 %v948, 7
        %v950 = vsub.s32 %v947, %v949
        %v951 = vrot.slane %v937, %v950
        %v952 = vcombine.low %v887, %v903
        %v953 = vcombine.high %v887, %v903
        %v955 = vunpack.c.l.s4 1934713408
        %v956 = vunpack.c.0.s8 %v955
        %v957 = vlaneseq
        %v958 = vshrl.u32 %v957, 7
        %v959 = vsub.s32 %v956, %v958
        %v960 = vrot.slane %v952, %v959
        %v962 = vunpack.c.l.s4 1934713408
        %v963 = vunpack.c.0.s8 %v962
        %v964 = vlaneseq
        %v965 = vshrl.u32 %v964, 7
        %v966 = vsub.s32 %v963, %v965
        %v967 = vrot.slane %v953, %v966
        %v968 = vcombine.low %v912, %v928
        %v969 = vcombine.high %v912, %v928
        %v971 = vunpack.c.l.s4 1934713408
        %v972 = vunpack.c.0.s8 %v971
        %v973 = vlaneseq
        %v974 = vshrl.u32 %v973, 7
        %v975 = vsub.s32 %v972, %v974
        %v976 = vrot.slane %v968, %v975
        %v978 = vunpack.c.l.s4 1934713408
        %v979 = vunpack.c.0.s8 %v978
        %v980 = vlaneseq
        %v981 = vshrl.u32 %v980, 7
        %v982 = vsub.s32 %v979, %v981
        %v983 = vrot.slane %v969, %v982
        %v984 = vcombine.low %v919, %v935
        %v985 = vcombine.high %v919, %v935
        %v987 = vunpack.c.l.s4 1934713408
        %v988 = vunpack.c.0.s8 %v987
        %v989 = vlaneseq
        %v990 = vshrl.u32 %v989, 7
        %v991 = vsub.s32 %v988, %v990
        %v992 = vrot.slane %v984, %v991
        %v994 = vunpack.c.l.s4 1934713408
        %v995 = vunpack.c.0.s8 %v994
        %v996 = vlaneseq
        %v997 = vshrl.u32 %v996, 7
        %v998 = vsub.s32 %v995, %v997
        %v999 = vrot.slane %v985, %v998
        %v1000 = vcombine.low %v944, %v976
        %v1001 = vcombine.high %v944, %v976
        %v1002 = vcombine.low %v951, %v983
        %v1003 = vcombine.high %v951, %v983
        %v1004 = vcombine.low %v960, %v992
        %v1005 = vcombine.high %v960, %v992
        %v1006 = vcombine.low %v967, %v999
        %v1007 = vcombine.high %v967, %v999
        %1010 = vrot.lane.b32.xlu0 %v593, 3
        %v1011 = vpop.permute.xlu0 %1010
        %1012 = vrot.lane.b32.xlu0 %v729, 3
        %v1013 = vpop.permute.xlu0 %1012
        %1018 = vrot.lane.b32.xlu0 %v594, 6
        %v1019 = vpop.permute.xlu0 %1018
        %1020 = vrot.lane.b32.xlu0 %v730, 6
        %v1021 = vpop.permute.xlu0 %1020
        %1026 = vrot.lane.b32.xlu0 %v595, 9
        %v1027 = vpop.permute.xlu0 %1026
        %1028 = vrot.lane.b32.xlu0 %v731, 9
        %v1029 = vpop.permute.xlu0 %1028
        %1034 = vrot.lane.b32.xlu0 %v596, 12
        %v1035 = vpop.permute.xlu0 %1034
        %1036 = vrot.lane.b32.xlu0 %v732, 12
        %v1037 = vpop.permute.xlu0 %1036
        %1042 = vrot.lane.b32.xlu0 %v597, 15
        %v1043 = vpop.permute.xlu0 %1042
        %1044 = vrot.lane.b32.xlu0 %v733, 15
        %v1045 = vpop.permute.xlu0 %1044
        %1050 = vrot.lane.b32.xlu0 %v598, 18
        %v1051 = vpop.permute.xlu0 %1050
        %1052 = vrot.lane.b32.xlu0 %v734, 18
        %v1053 = vpop.permute.xlu0 %1052
        %1058 = vrot.lane.b32.xlu0 %v599, 21
        %v1059 = vpop.permute.xlu0 %1058
        %1060 = vrot.lane.b32.xlu0 %v735, 21
        %v1061 = vpop.permute.xlu0 %1060
        %1066 = vrot.lane.b32.xlu0 %v864, 24
        %v1067 = vpop.permute.xlu0 %1066
        %1068 = vrot.lane.b32.xlu0 %v1000, 24
        %v1069 = vpop.permute.xlu0 %1068
        %1074 = vrot.lane.b32.xlu0 %v865, 27
        %v1075 = vpop.permute.xlu0 %1074
        %1076 = vrot.lane.b32.xlu0 %v1001, 27
        %v1077 = vpop.permute.xlu0 %1076
        %1082 = vrot.lane.b32.xlu0 %v866, 30
        %v1083 = vpop.permute.xlu0 %1082
        %1084 = vrot.lane.b32.xlu0 %v1002, 30
        %v1085 = vpop.permute.xlu0 %1084
        %1090 = vrot.lane.b32.xlu0 %v867, 33
        %v1091 = vpop.permute.xlu0 %1090
        %1092 = vrot.lane.b32.xlu0 %v1003, 33
        %v1093 = vpop.permute.xlu0 %1092
        %1098 = vrot.lane.b32.xlu0 %v868, 36
        %v1099 = vpop.permute.xlu0 %1098
        %1100 = vrot.lane.b32.xlu0 %v1004, 36
        %v1101 = vpop.permute.xlu0 %1100
        %1106 = vrot.lane.b32.xlu0 %v869, 39
        %v1107 = vpop.permute.xlu0 %1106
        %1108 = vrot.lane.b32.xlu0 %v1005, 39
        %v1109 = vpop.permute.xlu0 %1108
        %1114 = vrot.lane.b32.xlu0 %v870, 42
        %v1115 = vpop.permute.xlu0 %1114
        %1116 = vrot.lane.b32.xlu0 %v1006, 42
        %v1117 = vpop.permute.xlu0 %1116
        %1122 = vrot.lane.b32.xlu0 %v871, 45
        %v1123 = vpop.permute.xlu0 %1122
        %1124 = vrot.lane.b32.xlu0 %v1007, 45
        %v1125 = vpop.permute.xlu0 %1124
        %vm1128 = vcmask 23552
        %v1129 = vsel %vm1128, %v592, %v1011
        %v1130 = vsel %vm1128, %v728, %v1013
        %vm1131 = vcmask 48128
        %v1132 = vsel %vm1131, %v1129, %v1019
        %v1133 = vsel %vm1131, %v1130, %v1021
        %vm1134 = vcmask 72704
        %v1135 = vsel %vm1134, %v1132, %v1027
        %v1136 = vsel %vm1134, %v1133, %v1029
        %vm1137 = vcmask 97280
        %v1138 = vsel %vm1137, %v1135, %v1035
        %v1139 = vsel %vm1137, %v1136, %v1037
        %vm1140 = vcmask 121856
        %v1141 = vsel %vm1140, %v1138, %v1043
        %v1142 = vsel %vm1140, %v1139, %v1045
        %vm1143 = vcmask 146432
        %v1144 = vsel %vm1143, %v1141, %v1051
        %v1145 = vsel %vm1143, %v1142, %v1053
        %vm1146 = vcmask 171008
        %v1147 = vsel %vm1146, %v1144, %v1059
        %v1148 = vsel %vm1146, %v1145, %v1061
        %vm1149 = vcmask 195584
        %v1150 = vsel %vm1149, %v1147, %v1067
        %v1151 = vsel %vm1149, %v1148, %v1069
        %vm1152 = vcmask 220160
        %v1153 = vsel %vm1152, %v1150, %v1075
        %v1154 = vsel %vm1152, %v1151, %v1077
        %vm1155 = vcmask 244736
        %v1156 = vsel %vm1155, %v1153, %v1083
        %v1157 = vsel %vm1155, %v1154, %v1085
        %vm1158 = vcmask 269312
        %v1159 = vsel %vm1158, %v1156, %v1091
        %v1160 = vsel %vm1158, %v1157, %v1093
        %vm1161 = vcmask 293888
        %v1162 = vsel %vm1161, %v1159, %v1099
        %v1163 = vsel %vm1161, %v1160, %v1101
        %vm1164 = vcmask 318464
        %v1165 = vsel %vm1164, %v1162, %v1107
        %v1166 = vsel %vm1164, %v1163, %v1109
        %vm1167 = vcmask 343040
        %v1168 = vsel %vm1167, %v1165, %v1115
        %v1169 = vsel %vm1167, %v1166, %v1117
        %vm1170 = vcmask 367616
        %v1171 = vsel %vm1170, %v1168, %v1123
        %v1172 = vsel %vm1170, %v1169, %v1125
        %v1173 = vld [vmem:[%s242] sm:$0xff]
        %v1174 = vlaneseq
        %v1175 = vshrl.u32 %v1174, 7
        %v1176 = vsub.s32 0, %v1175
        %v1177 = vrot.slane %v1173, %v1176
        %1179 = vbcast.lane.b32.xlu0 %v1177, 256
        %v1180 = vpop.permute.xlu0 %1179
        %v1181 = vlaneseq
        %v1182 = vshrl.u32 %v1181, 7
        %v1183 = vsub.s32 1, %v1182
        %v1184 = vrot.slane %v1173, %v1183
        %1186 = vbcast.lane.b32.xlu0 %v1184, 256
        %v1187 = vpop.permute.xlu0 %1186
        %v1188 = vlaneseq
        %v1189 = vshrl.u32 %v1188, 7
        %v1190 = vsub.s32 2, %v1189
        %v1191 = vrot.slane %v1173, %v1190
        %1193 = vbcast.lane.b32.xlu0 %v1191, 256
        %v1194 = vpop.permute.xlu0 %1193
        %v1195 = vlaneseq
        %v1196 = vshrl.u32 %v1195, 7
        %v1197 = vsub.s32 3, %v1196
        %v1198 = vrot.slane %v1173, %v1197
        %1200 = vbcast.lane.b32.xlu0 %v1198, 256
        %v1201 = vpop.permute.xlu0 %1200
        %v1202 = vlaneseq
        %v1203 = vshrl.u32 %v1202, 7
        %v1204 = vsub.s32 4, %v1203
        %v1205 = vrot.slane %v1173, %v1204
        %1207 = vbcast.lane.b32.xlu0 %v1205, 256
        %v1208 = vpop.permute.xlu0 %1207
        %v1209 = vlaneseq
        %v1210 = vshrl.u32 %v1209, 7
        %v1211 = vsub.s32 5, %v1210
        %v1212 = vrot.slane %v1173, %v1211
        %1214 = vbcast.lane.b32.xlu0 %v1212, 256
        %v1215 = vpop.permute.xlu0 %1214
        %v1216 = vlaneseq
        %v1217 = vshrl.u32 %v1216, 7
        %v1218 = vsub.s32 6, %v1217
        %v1219 = vrot.slane %v1173, %v1218
        %1221 = vbcast.lane.b32.xlu0 %v1219, 256
        %v1222 = vpop.permute.xlu0 %1221
        %v1223 = vlaneseq
        %v1224 = vshrl.u32 %v1223, 7
        %v1225 = vsub.s32 7, %v1224
        %v1226 = vrot.slane %v1173, %v1225
        %1228 = vbcast.lane.b32.xlu0 %v1226, 256
        %v1229 = vpop.permute.xlu0 %1228
        %v1230 = vcombine.low %v1180, %v1187
        %v1231 = vcombine.high %v1180, %v1187
        %v1233 = vunpack.c.l.s4 1983009808
        %v1234 = vunpack.c.0.s8 %v1233
        %v1235 = vlaneseq
        %v1236 = vshrl.u32 %v1235, 7
        %v1237 = vsub.s32 %v1234, %v1236
        %v1238 = vrot.slane %v1230, %v1237
        %v1240 = vunpack.c.l.s4 1983009808
        %v1241 = vunpack.c.0.s8 %v1240
        %v1242 = vlaneseq
        %v1243 = vshrl.u32 %v1242, 7
        %v1244 = vsub.s32 %v1241, %v1243
        %v1245 = vrot.slane %v1231, %v1244
        %v1246 = vcombine.low %v1194, %v1201
        %v1247 = vcombine.high %v1194, %v1201
        %v1249 = vunpack.c.l.s4 1983009808
        %v1250 = vunpack.c.0.s8 %v1249
        %v1251 = vlaneseq
        %v1252 = vshrl.u32 %v1251, 7
        %v1253 = vsub.s32 %v1250, %v1252
        %v1254 = vrot.slane %v1246, %v1253
        %v1256 = vunpack.c.l.s4 1983009808
        %v1257 = vunpack.c.0.s8 %v1256
        %v1258 = vlaneseq
        %v1259 = vshrl.u32 %v1258, 7
        %v1260 = vsub.s32 %v1257, %v1259
        %v1261 = vrot.slane %v1247, %v1260
        %v1262 = vcombine.low %v1238, %v1238
        %v1263 = vcombine.high %v1238, %v1238
        %v1265 = vunpack.c.l.s4 1934713408
        %v1266 = vunpack.c.0.s8 %v1265
        %v1267 = vlaneseq
        %v1268 = vshrl.u32 %v1267, 7
        %v1269 = vsub.s32 %v1266, %v1268
        %v1270 = vrot.slane %v1262, %v1269
        %v1272 = vunpack.c.l.s4 1934713408
        %v1273 = vunpack.c.0.s8 %v1272
        %v1274 = vlaneseq
        %v1275 = vshrl.u32 %v1274, 7
        %v1276 = vsub.s32 %v1273, %v1275
        %v1277 = vrot.slane %v1263, %v1276
        %v1278 = vcombine.low %v1245, %v1245
        %v1279 = vcombine.high %v1245, %v1245
        %v1281 = vunpack.c.l.s4 1934713408
        %v1282 = vunpack.c.0.s8 %v1281
        %v1283 = vlaneseq
        %v1284 = vshrl.u32 %v1283, 7
        %v1285 = vsub.s32 %v1282, %v1284
        %v1286 = vrot.slane %v1278, %v1285
        %v1288 = vunpack.c.l.s4 1934713408
        %v1289 = vunpack.c.0.s8 %v1288
        %v1290 = vlaneseq
        %v1291 = vshrl.u32 %v1290, 7
        %v1292 = vsub.s32 %v1289, %v1291
        %v1293 = vrot.slane %v1279, %v1292
        %v1294 = vcombine.low %v1254, %v1254
        %v1295 = vcombine.high %v1254, %v1254
        %v1297 = vunpack.c.l.s4 1934713408
        %v1298 = vunpack.c.0.s8 %v1297
        %v1299 = vlaneseq
        %v1300 = vshrl.u32 %v1299, 7
        %v1301 = vsub.s32 %v1298, %v1300
        %v1302 = vrot.slane %v1294, %v1301
        %v1304 = vunpack.c.l.s4 1934713408
        %v1305 = vunpack.c.0.s8 %v1304
        %v1306 = vlaneseq
        %v1307 = vshrl.u32 %v1306, 7
        %v1308 = vsub.s32 %v1305, %v1307
        %v1309 = vrot.slane %v1295, %v1308
        %v1310 = vcombine.low %v1261, %v1261
        %v1311 = vcombine.high %v1261, %v1261
        %v1313 = vunpack.c.l.s4 1934713408
        %v1314 = vunpack.c.0.s8 %v1313
        %v1315 = vlaneseq
        %v1316 = vshrl.u32 %v1315, 7
        %v1317 = vsub.s32 %v1314, %v1316
        %v1318 = vrot.slane %v1310, %v1317
        %v1320 = vunpack.c.l.s4 1934713408
        %v1321 = vunpack.c.0.s8 %v1320
        %v1322 = vlaneseq
        %v1323 = vshrl.u32 %v1322, 7
        %v1324 = vsub.s32 %v1321, %v1323
        %v1325 = vrot.slane %v1311, %v1324
        %v1326 = vcombine.low %v1270, %v1302
        %v1327 = vcombine.high %v1270, %v1302
        %v1328 = vcombine.low %v1277, %v1309
        %v1329 = vcombine.high %v1277, %v1309
        %v1330 = vcombine.low %v1286, %v1318
        %v1331 = vcombine.high %v1286, %v1318
        %v1332 = vcombine.low %v1293, %v1325
        %v1333 = vcombine.high %v1293, %v1325
        %v1334 = vcombine.low %v1208, %v1215
        %v1335 = vcombine.high %v1208, %v1215
        %v1337 = vunpack.c.l.s4 1983009808
        %v1338 = vunpack.c.0.s8 %v1337
        %v1339 = vlaneseq
        %v1340 = vshrl.u32 %v1339, 7
        %v1341 = vsub.s32 %v1338, %v1340
        %v1342 = vrot.slane %v1334, %v1341
        %v1344 = vunpack.c.l.s4 1983009808
        %v1345 = vunpack.c.0.s8 %v1344
        %v1346 = vlaneseq
        %v1347 = vshrl.u32 %v1346, 7
        %v1348 = vsub.s32 %v1345, %v1347
        %v1349 = vrot.slane %v1335, %v1348
        %v1350 = vcombine.low %v1222, %v1229
        %v1351 = vcombine.high %v1222, %v1229
        %v1353 = vunpack.c.l.s4 1983009808
        %v1354 = vunpack.c.0.s8 %v1353
        %v1355 = vlaneseq
        %v1356 = vshrl.u32 %v1355, 7
        %v1357 = vsub.s32 %v1354, %v1356
        %v1358 = vrot.slane %v1350, %v1357
        %v1360 = vunpack.c.l.s4 1983009808
        %v1361 = vunpack.c.0.s8 %v1360
        %v1362 = vlaneseq
        %v1363 = vshrl.u32 %v1362, 7
        %v1364 = vsub.s32 %v1361, %v1363
        %v1365 = vrot.slane %v1351, %v1364
        %v1366 = vcombine.low %v1342, %v1342
        %v1367 = vcombine.high %v1342, %v1342
        %v1369 = vunpack.c.l.s4 1934713408
        %v1370 = vunpack.c.0.s8 %v1369
        %v1371 = vlaneseq
        %v1372 = vshrl.u32 %v1371, 7
        %v1373 = vsub.s32 %v1370, %v1372
        %v1374 = vrot.slane %v1366, %v1373
        %v1376 = vunpack.c.l.s4 1934713408
        %v1377 = vunpack.c.0.s8 %v1376
        %v1378 = vlaneseq
        %v1379 = vshrl.u32 %v1378, 7
        %v1380 = vsub.s32 %v1377, %v1379
        %v1381 = vrot.slane %v1367, %v1380
        %v1382 = vcombine.low %v1349, %v1349
        %v1383 = vcombine.high %v1349, %v1349
        %v1385 = vunpack.c.l.s4 1934713408
        %v1386 = vunpack.c.0.s8 %v1385
        %v1387 = vlaneseq
        %v1388 = vshrl.u32 %v1387, 7
        %v1389 = vsub.s32 %v1386, %v1388
        %v1390 = vrot.slane %v1382, %v1389
        %v1392 = vunpack.c.l.s4 1934713408
        %v1393 = vunpack.c.0.s8 %v1392
        %v1394 = vlaneseq
        %v1395 = vshrl.u32 %v1394, 7
        %v1396 = vsub.s32 %v1393, %v1395
        %v1397 = vrot.slane %v1383, %v1396
        %v1398 = vcombine.low %v1358, %v1358
        %v1399 = vcombine.high %v1358, %v1358
        %v1401 = vunpack.c.l.s4 1934713408
        %v1402 = vunpack.c.0.s8 %v1401
        %v1403 = vlaneseq
        %v1404 = vshrl.u32 %v1403, 7
        %v1405 = vsub.s32 %v1402, %v1404
        %v1406 = vrot.slane %v1398, %v1405
        %v1408 = vunpack.c.l.s4 1934713408
        %v1409 = vunpack.c.0.s8 %v1408
        %v1410 = vlaneseq
        %v1411 = vshrl.u32 %v1410, 7
        %v1412 = vsub.s32 %v1409, %v1411
        %v1413 = vrot.slane %v1399, %v1412
        %v1414 = vcombine.low %v1365, %v1365
        %v1415 = vcombine.high %v1365, %v1365
        %v1417 = vunpack.c.l.s4 1934713408
        %v1418 = vunpack.c.0.s8 %v1417
        %v1419 = vlaneseq
        %v1420 = vshrl.u32 %v1419, 7
        %v1421 = vsub.s32 %v1418, %v1420
        %v1422 = vrot.slane %v1414, %v1421
        %v1424 = vunpack.c.l.s4 1934713408
        %v1425 = vunpack.c.0.s8 %v1424
        %v1426 = vlaneseq
        %v1427 = vshrl.u32 %v1426, 7
        %v1428 = vsub.s32 %v1425, %v1427
        %v1429 = vrot.slane %v1415, %v1428
        %v1430 = vcombine.low %v1374, %v1406
        %v1431 = vcombine.high %v1374, %v1406
        %v1432 = vcombine.low %v1381, %v1413
        %v1433 = vcombine.high %v1381, %v1413
        %v1434 = vcombine.low %v1390, %v1422
        %v1435 = vcombine.high %v1390, %v1422
        %v1436 = vcombine.low %v1397, %v1429
        %v1437 = vcombine.high %v1397, %v1429
        %1440 = vrot.lane.b32.xlu0 %v1327, 6
        %v1441 = vpop.permute.xlu0 %1440
        %1442 = vrot.lane.b32.xlu0 %v1431, 6
        %v1443 = vpop.permute.xlu0 %1442
        %1448 = vrot.lane.b32.xlu0 %v1328, 12
        %v1449 = vpop.permute.xlu0 %1448
        %1450 = vrot.lane.b32.xlu0 %v1432, 12
        %v1451 = vpop.permute.xlu0 %1450
        %1456 = vrot.lane.b32.xlu0 %v1329, 18
        %v1457 = vpop.permute.xlu0 %1456
        %1458 = vrot.lane.b32.xlu0 %v1433, 18
        %v1459 = vpop.permute.xlu0 %1458
        %1464 = vrot.lane.b32.xlu0 %v1330, 24
        %v1465 = vpop.permute.xlu0 %1464
        %1466 = vrot.lane.b32.xlu0 %v1434, 24
        %v1467 = vpop.permute.xlu0 %1466
        %1472 = vrot.lane.b32.xlu0 %v1331, 30
        %v1473 = vpop.permute.xlu0 %1472
        %1474 = vrot.lane.b32.xlu0 %v1435, 30
        %v1475 = vpop.permute.xlu0 %1474
        %1480 = vrot.lane.b32.xlu0 %v1332, 36
        %v1481 = vpop.permute.xlu0 %1480
        %1482 = vrot.lane.b32.xlu0 %v1436, 36
        %v1483 = vpop.permute.xlu0 %1482
        %1488 = vrot.lane.b32.xlu0 %v1333, 42
        %v1489 = vpop.permute.xlu0 %1488
        %1490 = vrot.lane.b32.xlu0 %v1437, 42
        %v1491 = vpop.permute.xlu0 %1490
        %v1494 = vsel %vm1131, %v1326, %v1441
        %v1495 = vsel %vm1131, %v1430, %v1443
        %v1496 = vsel %vm1137, %v1494, %v1449
        %v1497 = vsel %vm1137, %v1495, %v1451
        %v1498 = vsel %vm1143, %v1496, %v1457
        %v1499 = vsel %vm1143, %v1497, %v1459
        %v1500 = vsel %vm1149, %v1498, %v1465
        %v1501 = vsel %vm1149, %v1499, %v1467
        %v1502 = vsel %vm1155, %v1500, %v1473
        %v1503 = vsel %vm1155, %v1501, %v1475
        %v1504 = vsel %vm1161, %v1502, %v1481
        %v1505 = vsel %vm1161, %v1503, %v1483
        %v1506 = vsel %vm1167, %v1504, %v1489
        %v1507 = vsel %vm1167, %v1505, %v1491
        %v1508 = vld [vmem:[%s251] sm:$0xff]
        %v1509 = vlaneseq
        %v1510 = vshrl.u32 %v1509, 7
        %v1511 = vsub.s32 0, %v1510
        %v1512 = vrot.slane %v1508, %v1511
        %1514 = vbcast.lane.b32.xlu0 %v1512, 256
        %v1515 = vpop.permute.xlu0 %1514
        %v1516 = vlaneseq
        %v1517 = vshrl.u32 %v1516, 7
        %v1518 = vsub.s32 1, %v1517
        %v1519 = vrot.slane %v1508, %v1518
        %1521 = vbcast.lane.b32.xlu0 %v1519, 256
        %v1522 = vpop.permute.xlu0 %1521
        %v1523 = vlaneseq
        %v1524 = vshrl.u32 %v1523, 7
        %v1525 = vsub.s32 2, %v1524
        %v1526 = vrot.slane %v1508, %v1525
        %1528 = vbcast.lane.b32.xlu0 %v1526, 256
        %v1529 = vpop.permute.xlu0 %1528
        %v1530 = vlaneseq
        %v1531 = vshrl.u32 %v1530, 7
        %v1532 = vsub.s32 3, %v1531
        %v1533 = vrot.slane %v1508, %v1532
        %1535 = vbcast.lane.b32.xlu0 %v1533, 256
        %v1536 = vpop.permute.xlu0 %1535
        %v1537 = vlaneseq
        %v1538 = vshrl.u32 %v1537, 7
        %v1539 = vsub.s32 4, %v1538
        %v1540 = vrot.slane %v1508, %v1539
        %1542 = vbcast.lane.b32.xlu0 %v1540, 256
        %v1543 = vpop.permute.xlu0 %1542
        %v1544 = vlaneseq
        %v1545 = vshrl.u32 %v1544, 7
        %v1546 = vsub.s32 5, %v1545
        %v1547 = vrot.slane %v1508, %v1546
        %1549 = vbcast.lane.b32.xlu0 %v1547, 256
        %v1550 = vpop.permute.xlu0 %1549
        %v1551 = vlaneseq
        %v1552 = vshrl.u32 %v1551, 7
        %v1553 = vsub.s32 6, %v1552
        %v1554 = vrot.slane %v1508, %v1553
        %1556 = vbcast.lane.b32.xlu0 %v1554, 256
        %v1557 = vpop.permute.xlu0 %1556
        %v1558 = vlaneseq
        %v1559 = vshrl.u32 %v1558, 7
        %v1560 = vsub.s32 7, %v1559
        %v1561 = vrot.slane %v1508, %v1560
        %1563 = vbcast.lane.b32.xlu0 %v1561, 256
        %v1564 = vpop.permute.xlu0 %1563
        %v1565 = vcombine.low %v1515, %v1522
        %v1566 = vcombine.high %v1515, %v1522
        %v1568 = vunpack.c.l.s4 1983009808
        %v1569 = vunpack.c.0.s8 %v1568
        %v1570 = vlaneseq
        %v1571 = vshrl.u32 %v1570, 7
        %v1572 = vsub.s32 %v1569, %v1571
        %v1573 = vrot.slane %v1565, %v1572
        %v1575 = vunpack.c.l.s4 1983009808
        %v1576 = vunpack.c.0.s8 %v1575
        %v1577 = vlaneseq
        %v1578 = vshrl.u32 %v1577, 7
        %v1579 = vsub.s32 %v1576, %v1578
        %v1580 = vrot.slane %v1566, %v1579
        %v1581 = vcombine.low %v1529, %v1536
        %v1582 = vcombine.high %v1529, %v1536
        %v1584 = vunpack.c.l.s4 1983009808
        %v1585 = vunpack.c.0.s8 %v1584
        %v1586 = vlaneseq
        %v1587 = vshrl.u32 %v1586, 7
        %v1588 = vsub.s32 %v1585, %v1587
        %v1589 = vrot.slane %v1581, %v1588
        %v1591 = vunpack.c.l.s4 1983009808
        %v1592 = vunpack.c.0.s8 %v1591
        %v1593 = vlaneseq
        %v1594 = vshrl.u32 %v1593, 7
        %v1595 = vsub.s32 %v1592, %v1594
        %v1596 = vrot.slane %v1582, %v1595
        %v1597 = vcombine.low %v1573, %v1573
        %v1598 = vcombine.high %v1573, %v1573
        %v1600 = vunpack.c.l.s4 1934713408
        %v1601 = vunpack.c.0.s8 %v1600
        %v1602 = vlaneseq
        %v1603 = vshrl.u32 %v1602, 7
        %v1604 = vsub.s32 %v1601, %v1603
        %v1605 = vrot.slane %v1597, %v1604
        %v1607 = vunpack.c.l.s4 1934713408
        %v1608 = vunpack.c.0.s8 %v1607
        %v1609 = vlaneseq
        %v1610 = vshrl.u32 %v1609, 7
        %v1611 = vsub.s32 %v1608, %v1610
        %v1612 = vrot.slane %v1598, %v1611
        %v1613 = vcombine.low %v1580, %v1580
        %v1614 = vcombine.high %v1580, %v1580
        %v1616 = vunpack.c.l.s4 1934713408
        %v1617 = vunpack.c.0.s8 %v1616
        %v1618 = vlaneseq
        %v1619 = vshrl.u32 %v1618, 7
        %v1620 = vsub.s32 %v1617, %v1619
        %v1621 = vrot.slane %v1613, %v1620
        %v1623 = vunpack.c.l.s4 1934713408
        %v1624 = vunpack.c.0.s8 %v1623
        %v1625 = vlaneseq
        %v1626 = vshrl.u32 %v1625, 7
        %v1627 = vsub.s32 %v1624, %v1626
        %v1628 = vrot.slane %v1614, %v1627
        %v1629 = vcombine.low %v1589, %v1589
        %v1630 = vcombine.high %v1589, %v1589
        %v1632 = vunpack.c.l.s4 1934713408
        %v1633 = vunpack.c.0.s8 %v1632
        %v1634 = vlaneseq
        %v1635 = vshrl.u32 %v1634, 7
        %v1636 = vsub.s32 %v1633, %v1635
        %v1637 = vrot.slane %v1629, %v1636
        %v1639 = vunpack.c.l.s4 1934713408
        %v1640 = vunpack.c.0.s8 %v1639
        %v1641 = vlaneseq
        %v1642 = vshrl.u32 %v1641, 7
        %v1643 = vsub.s32 %v1640, %v1642
        %v1644 = vrot.slane %v1630, %v1643
        %v1645 = vcombine.low %v1596, %v1596
        %v1646 = vcombine.high %v1596, %v1596
        %v1648 = vunpack.c.l.s4 1934713408
        %v1649 = vunpack.c.0.s8 %v1648
        %v1650 = vlaneseq
        %v1651 = vshrl.u32 %v1650, 7
        %v1652 = vsub.s32 %v1649, %v1651
        %v1653 = vrot.slane %v1645, %v1652
        %v1655 = vunpack.c.l.s4 1934713408
        %v1656 = vunpack.c.0.s8 %v1655
        %v1657 = vlaneseq
        %v1658 = vshrl.u32 %v1657, 7
        %v1659 = vsub.s32 %v1656, %v1658
        %v1660 = vrot.slane %v1646, %v1659
        %v1661 = vcombine.low %v1605, %v1637
        %v1662 = vcombine.high %v1605, %v1637
        %v1663 = vcombine.low %v1612, %v1644
        %v1664 = vcombine.high %v1612, %v1644
        %v1665 = vcombine.low %v1621, %v1653
        %v1666 = vcombine.high %v1621, %v1653
        %v1667 = vcombine.low %v1628, %v1660
        %v1668 = vcombine.high %v1628, %v1660
        %v1669 = vcombine.low %v1543, %v1550
        %v1670 = vcombine.high %v1543, %v1550
        %v1672 = vunpack.c.l.s4 1983009808
        %v1673 = vunpack.c.0.s8 %v1672
        %v1674 = vlaneseq
        %v1675 = vshrl.u32 %v1674, 7
        %v1676 = vsub.s32 %v1673, %v1675
        %v1677 = vrot.slane %v1669, %v1676
        %v1679 = vunpack.c.l.s4 1983009808
        %v1680 = vunpack.c.0.s8 %v1679
        %v1681 = vlaneseq
        %v1682 = vshrl.u32 %v1681, 7
        %v1683 = vsub.s32 %v1680, %v1682
        %v1684 = vrot.slane %v1670, %v1683
        %v1685 = vcombine.low %v1557, %v1564
        %v1686 = vcombine.high %v1557, %v1564
        %v1688 = vunpack.c.l.s4 1983009808
        %v1689 = vunpack.c.0.s8 %v1688
        %v1690 = vlaneseq
        %v1691 = vshrl.u32 %v1690, 7
        %v1692 = vsub.s32 %v1689, %v1691
        %v1693 = vrot.slane %v1685, %v1692
        %v1695 = vunpack.c.l.s4 1983009808
        %v1696 = vunpack.c.0.s8 %v1695
        %v1697 = vlaneseq
        %v1698 = vshrl.u32 %v1697, 7
        %v1699 = vsub.s32 %v1696, %v1698
        %v1700 = vrot.slane %v1686, %v1699
        %v1701 = vcombine.low %v1677, %v1677
        %v1702 = vcombine.high %v1677, %v1677
        %v1704 = vunpack.c.l.s4 1934713408
        %v1705 = vunpack.c.0.s8 %v1704
        %v1706 = vlaneseq
        %v1707 = vshrl.u32 %v1706, 7
        %v1708 = vsub.s32 %v1705, %v1707
        %v1709 = vrot.slane %v1701, %v1708
        %v1711 = vunpack.c.l.s4 1934713408
        %v1712 = vunpack.c.0.s8 %v1711
        %v1713 = vlaneseq
        %v1714 = vshrl.u32 %v1713, 7
        %v1715 = vsub.s32 %v1712, %v1714
        %v1716 = vrot.slane %v1702, %v1715
        %v1717 = vcombine.low %v1684, %v1684
        %v1718 = vcombine.high %v1684, %v1684
        %v1720 = vunpack.c.l.s4 1934713408
        %v1721 = vunpack.c.0.s8 %v1720
        %v1722 = vlaneseq
        %v1723 = vshrl.u32 %v1722, 7
        %v1724 = vsub.s32 %v1721, %v1723
        %v1725 = vrot.slane %v1717, %v1724
        %v1727 = vunpack.c.l.s4 1934713408
        %v1728 = vunpack.c.0.s8 %v1727
        %v1729 = vlaneseq
        %v1730 = vshrl.u32 %v1729, 7
        %v1731 = vsub.s32 %v1728, %v1730
        %v1732 = vrot.slane %v1718, %v1731
        %v1733 = vcombine.low %v1693, %v1693
        %v1734 = vcombine.high %v1693, %v1693
        %v1736 = vunpack.c.l.s4 1934713408
        %v1737 = vunpack.c.0.s8 %v1736
        %v1738 = vlaneseq
        %v1739 = vshrl.u32 %v1738, 7
        %v1740 = vsub.s32 %v1737, %v1739
        %v1741 = vrot.slane %v1733, %v1740
        %v1743 = vunpack.c.l.s4 1934713408
        %v1744 = vunpack.c.0.s8 %v1743
        %v1745 = vlaneseq
        %v1746 = vshrl.u32 %v1745, 7
        %v1747 = vsub.s32 %v1744, %v1746
        %v1748 = vrot.slane %v1734, %v1747
        %v1749 = vcombine.low %v1700, %v1700
        %v1750 = vcombine.high %v1700, %v1700
        %v1752 = vunpack.c.l.s4 1934713408
        %v1753 = vunpack.c.0.s8 %v1752
        %v1754 = vlaneseq
        %v1755 = vshrl.u32 %v1754, 7
        %v1756 = vsub.s32 %v1753, %v1755
        %v1757 = vrot.slane %v1749, %v1756
        %v1759 = vunpack.c.l.s4 1934713408
        %v1760 = vunpack.c.0.s8 %v1759
        %v1761 = vlaneseq
        %v1762 = vshrl.u32 %v1761, 7
        %v1763 = vsub.s32 %v1760, %v1762
        %v1764 = vrot.slane %v1750, %v1763
        %v1765 = vcombine.low %v1709, %v1741
        %v1766 = vcombine.high %v1709, %v1741
        %v1767 = vcombine.low %v1716, %v1748
        %v1768 = vcombine.high %v1716, %v1748
        %v1769 = vcombine.low %v1725, %v1757
        %v1770 = vcombine.high %v1725, %v1757
        %v1771 = vcombine.low %v1732, %v1764
        %v1772 = vcombine.high %v1732, %v1764
        %1775 = vrot.lane.b32.xlu0 %v1662, 6
        %v1776 = vpop.permute.xlu0 %1775
        %1777 = vrot.lane.b32.xlu0 %v1766, 6
        %v1778 = vpop.permute.xlu0 %1777
        %1783 = vrot.lane.b32.xlu0 %v1663, 12
        %v1784 = vpop.permute.xlu0 %1783
        %1785 = vrot.lane.b32.xlu0 %v1767, 12
        %v1786 = vpop.permute.xlu0 %1785
        %1791 = vrot.lane.b32.xlu0 %v1664, 18
        %v1792 = vpop.permute.xlu0 %1791
        %1793 = vrot.lane.b32.xlu0 %v1768, 18
        %v1794 = vpop.permute.xlu0 %1793
        %1799 = vrot.lane.b32.xlu0 %v1665, 24
        %v1800 = vpop.permute.xlu0 %1799
        %1801 = vrot.lane.b32.xlu0 %v1769, 24
        %v1802 = vpop.permute.xlu0 %1801
        %1807 = vrot.lane.b32.xlu0 %v1666, 30
        %v1808 = vpop.permute.xlu0 %1807
        %1809 = vrot.lane.b32.xlu0 %v1770, 30
        %v1810 = vpop.permute.xlu0 %1809
        %1815 = vrot.lane.b32.xlu0 %v1667, 36
        %v1816 = vpop.permute.xlu0 %1815
        %1817 = vrot.lane.b32.xlu0 %v1771, 36
        %v1818 = vpop.permute.xlu0 %1817
        %1823 = vrot.lane.b32.xlu0 %v1668, 42
        %v1824 = vpop.permute.xlu0 %1823
        %1825 = vrot.lane.b32.xlu0 %v1772, 42
        %v1826 = vpop.permute.xlu0 %1825
        %v1829 = vsel %vm1131, %v1661, %v1776
        %v1830 = vsel %vm1131, %v1765, %v1778
        %v1831 = vsel %vm1137, %v1829, %v1784
        %v1832 = vsel %vm1137, %v1830, %v1786
        %v1833 = vsel %vm1143, %v1831, %v1792
        %v1834 = vsel %vm1143, %v1832, %v1794
        %v1835 = vsel %vm1149, %v1833, %v1800
        %v1836 = vsel %vm1149, %v1834, %v1802
        %v1837 = vsel %vm1155, %v1835, %v1808
        %v1838 = vsel %vm1155, %v1836, %v1810
        %v1839 = vsel %vm1161, %v1837, %v1816
        %v1840 = vsel %vm1161, %v1838, %v1818
        %v1841 = vsel %vm1167, %v1839, %v1824
        %v1842 = vsel %vm1167, %v1840, %v1826
        %v1843 = vlaneseq
        %v1844 = vand.u32 %v1843, 127
        %vm1845 = vcmp.lt.s32.totalorder %v1844, 0
        %v1846 = vsub.s32 0, %v1844
        %v1847 = vsel %vm1845, %v1846, %v1844
        %v1848 = vmul.u32.u64.compose %v1847, 2863311531
        %v1849 = vextract.low.u32 %v1848
        %v1850 = vextract.high.u32 %v1848
        %v1851 = vshrl.u32 %v1850, 1
        %v1852 = vmul.u32 %v1851, 3
        %v1853 = vsub.s32 %v1847, %v1852
        %v1854 = vsub.s32 0, %v1853
        %v1855 = vsel %vm1845, %v1854, %v1853
        %vm1856 = vcmp.ne.s32.totalorder %v1855, 0
        %vm1857 = vcmp.lt.s32.totalorder %v1855, 0
        %vm1858 = vmand %vm1857, %vm1856
        %v1859 = vadd.s32 %v1855, 3
        %v1860 = vsel %vm1858, %v1859, %v1855
        %vm1861 = vcmp.eq.s32.totalorder %v1860, 0
        %vm1862 = vcmp.eq.s32.totalorder %v1860, 1
        %v1863 = vsel %vm1862, %v1506, %v1841
        %v1864 = vsel %vm1862, %v1507, %v1842
        %v1865 = vsel %vm1861, %v1171, %v1863
        %v1866 = vsel %vm1861, %v1172, %v1864
        %vm1867 = vcmask 392192
        %1868 = vst.msk [vmem:[%s283] sm:$0xff] %vm1867, %v1865
        %1869 = vst.msk [vmem:[%s283 + $0x8] sm:$0xff] %vm1867, %v1866
        %s1870 = sand.u32 %s129, 1
        %s1871 = scalar_lea.sflag [#allocation4], %s1870
        %s1872 = sand.u32 %s129, 1
        %s1873 = smul.addr %s1872, 16
        %s1874 = scalar_lea.vmem [#allocation8], %s1873
        // Predicated region
        $region45: #{tpu_custom_call.1} parent=31 // pred_check
          %p1875 = pneg %p139
        $region46: #{tpu_custom_call.1} parent=31 // pred_check_branch
          %1877 = sbr.rel (%p1875) target = $region48
        $region47: #{tpu_custom_call.1} parent=31 // pred_region
          %s1878 = smul.u32 2, %s28
          %s1880 = ssub.s32 256, 256
          %1881 = vsyncadd %s1871, %s1880
          %s1882 = smul.addr %s27, 2
          %s1883 = sadd.s32 %s1878, %s1882
          %s1884 = smul.addr %s1883, 128
          %s1885 = scalar_lea.hbm %s3, %s1884
          %s1886 = sshll.u32 %s1874, 4
          %s1887 = int_to_ptr.vmem [resolvable:$true] %s1886
          %1892 = dma.vmem_to_hbm [thread:$0]  %s1887, 256, %s1885, %s1871, 128, 128, 8
        $region48: #{tpu_custom_call.1} parent=31 // pred_fallthru
          _
      $region32: #{tpu_custom_call.1} parent=5 // pred_fallthru
        _
      %p1893 = scmp.le.s32.totalorder 2, %s18
      // Predicated region
      $region49: #{tpu_custom_call.1} parent=5 // pred_check
        %p1894 = pneg %p1893
      $region50: #{tpu_custom_call.1} parent=5 // pred_check_branch
        %1896 = sbr.rel (%p1894) target = $region52
      $region51: #{tpu_custom_call.1} parent=5 // pred_region
        %s1897 = ssub.s32 %s18, 2
        // Predicated region
        $region53: #{tpu_custom_call.1} parent=51 // pred_check
          %p1898 = pneg %p145
        $region54: #{tpu_custom_call.1} parent=51 // pred_check_branch
          %1900 = sbr.rel (%p1898) target = $region56
        $region55: #{tpu_custom_call.1} parent=51 // pred_region
          %s1901 = sand.u32 %s130, 1
          %s1902 = scalar_lea.sflag [#allocation4], %s1901
          %s1903 = sand.u32 %s130, 1
          %s1904 = smul.addr %s1903, 16
          %s1905 = scalar_lea.vmem [#allocation8], %s1904
          %1906 = dma.done %s1902, 256
        $region56: #{tpu_custom_call.1} parent=51 // pred_fallthru
          _
      $region52: #{tpu_custom_call.1} parent=5 // pred_fallthru
        _
    $region6: #{tpu_custom_call.1} parent=1 // loop_footer
      %s22 = sadd.s32 1, %s18
    $region7: #{tpu_custom_call.1} parent=1 // loop_footer_branch
      %17 = sbr.rel target = $region3
    $region8: #{tpu_custom_call.1} parent=1 // loop_exit
      _
    %1907 = vsyncpa [#allocation3], 1
    %s1908 = scalar_lea.sflag [#allocation3], 1
    %1909 = vsyncpa %s1908, 1
    %1910 = vsyncpa [#allocation6], 1
    %s1911 = scalar_lea.sflag [#allocation6], 1
    %1912 = vsyncpa %s1911, 1
    %1913 = vsyncpa [#allocation4], 1
    %s1914 = scalar_lea.sflag [#allocation4], 1
    %1915 = vsyncpa %s1914, 1

</llo_original>
